<compile_context>
chip_gen: v7x
topology: tpu7x:2x2x1
jax: 0.10.0
libtpu: 0.0.40
codegen_flags: <defaults>
</compile_context>

<pallas_src>
import jax
import jax.numpy as jnp
from jax.experimental import pallas as pl
from jax.experimental.pallas import tpu as pltpu

TB = 512       # batch tile (lanes): multiple of 256 (v6e/v7x MXU) and 128 (v5e)
K1_PAD = 16    # first-layer fan-in padded 9 -> 16 (sublane-friendly)


def mlp_kernel(x_ref, w1_ref, b1_ref, w2_ref, b2_ref, w3_ref, b3_ref,
               w4_ref, b4_ref, o_ref):
    """Fused forward for one batch tile of TB columns (feature-major layout)."""
    # Layer 1: (64,16)bf16 @ (16,TB)bf16 -> f32, bias (64,1) + ReLU in f32.
    h1 = jnp.dot(w1_ref[...], x_ref[...],
                 preferred_element_type=jnp.float32) + b1_ref[...]
    h1 = jnp.maximum(h1, 0.0)

    # Layer 2: (256,64) @ (64,TB)
    h2 = jnp.dot(w2_ref[...], h1.astype(jnp.bfloat16),
                 preferred_element_type=jnp.float32) + b2_ref[...]
    h2 = jnp.maximum(h2, 0.0)

    # Layer 3: (64,256) @ (256,TB)
    h3 = jnp.dot(w3_ref[...], h2.astype(jnp.bfloat16),
                 preferred_element_type=jnp.float32) + b3_ref[...]
    h3 = jnp.maximum(h3, 0.0)

    # Layer 4 (64 -> 1): VPU multiply + sublane (XLU) reduce -> lane-dense (1,TB).
    out = jnp.sum(h3 * w4_ref[...], axis=0, keepdims=True) + b4_ref[...]
    o_ref[...] = out.astype(o_ref.dtype)


def simple_convnet_forward(x, params):
    """x: (B, 9) float32. Returns (B, 1) float32."""
    (w1, b1), (w2, b2), (w3, b3), (w4, b4) = params
    B, F = x.shape
    n_tiles = pl.cdiv(B, TB)
    B_pad = n_tiles * TB

    # Pad batch to a TB multiple, fan-in 9 -> 16 (zeros are inert), transpose to
    # feature-major (batch on lanes), cast MXU operands to bf16.  The tiny
    # layer-4 weight and all biases stay f32 on the VPU path.
    x_t = jnp.pad(x, ((0, B_pad - B), (0, K1_PAD - F))).T.astype(jnp.bfloat16)
    w1_t = jnp.pad(w1, ((0, K1_PAD - w1.shape[0]), (0, 0))).T.astype(jnp.bfloat16)
    w2_t = w2.T.astype(jnp.bfloat16)            # (256, 64)
    w3_t = w3.T.astype(jnp.bfloat16)            # (64, 256)
    w4_c = w4.reshape(64, 1)                    # column, f32, VPU
    b1_c, b2_c, b3_c = b1.reshape(64, 1), b2.reshape(256, 1), b3.reshape(64, 1)
    b4_c = b4.reshape(1, 1)

    def const(shape):
        # Full-array block with constant index_map: DMA'd once, VMEM-resident.
        return pl.BlockSpec(shape, lambda i: (0, 0))

    flops = 2 * B_pad * (K1_PAD * 64 + 64 * 256 + 256 * 64 + 64)
    bytes_accessed = (x_t.size * 2 + w1_t.size * 2 + w2_t.size * 2 + w3_t.size * 2
                      + (b1_c.size + b2_c.size + b3_c.size + w4_c.size + b4_c.size) * 4
                      + B_pad * 4)

    out = pl.pallas_call(
        mlp_kernel,
        out_shape=jax.ShapeDtypeStruct((1, B_pad), jnp.float32),
        grid=(n_tiles,),
        in_specs=[
            pl.BlockSpec((K1_PAD, TB), lambda i: (0, i)),  # x tile (pipelined)
            const((64, K1_PAD)),   # w1^T
            const((64, 1)),        # b1
            const((256, 64)),      # w2^T
            const((256, 1)),       # b2
            const((64, 256)),      # w3^T
            const((64, 1)),        # b3
            const((64, 1)),        # w4 (column, f32)
            const((1, 1)),         # b4
        ],
        out_specs=pl.BlockSpec((1, TB), lambda i: (0, i)),  # lane-dense store
        compiler_params=pltpu.CompilerParams(
            dimension_semantics=("parallel",)),
        cost_estimate=pl.CostEstimate(
            flops=flops, bytes_accessed=bytes_accessed, transcendentals=0),
    )(x_t, w1_t, b1_c, w2_t, b2_c, w3_t, b3_c, w4_c, b4_c)

    return out[0, :B].reshape(B, 1)


def init_linear(key, fan_in, fan_out):
    """Deterministic init mimicking PyTorch's nn.Linear default (+-1/sqrt(fan_in)).

    Weights are (fan_in, fan_out) so the logical model computes x @ W + b,
    matching PyTorch's x @ weight.T + bias with weight of shape (out, in).
    """
    kw, kb = jax.random.split(key)
    bound = 1.0 / jnp.sqrt(float(fan_in))
    w = jax.random.uniform(kw, (fan_in, fan_out), jnp.float32, -bound, bound)
    b = jax.random.uniform(kb, (1, fan_out), jnp.float32, -bound, bound)
    return w, b


def reference_forward(x, params):
    """Pure-JAX reference with matching bf16 operand / f32 accumulate math."""
    (w1, b1), (w2, b2), (w3, b3), (w4, b4) = params
    bf = jnp.bfloat16
    h = jnp.maximum(jnp.dot(x.astype(bf), w1.astype(bf),
                            preferred_element_type=jnp.float32) + b1, 0.0)
    h = jnp.maximum(jnp.dot(h.astype(bf), w2.astype(bf),
                            preferred_element_type=jnp.float32) + b2, 0.0)
    h = jnp.maximum(jnp.dot(h.astype(bf), w3.astype(bf),
                            preferred_element_type=jnp.float32) + b3, 0.0)
    return jnp.sum(h * w4.reshape(1, 64), axis=-1, keepdims=True) + b4


if __name__ == "__main__":
    key = jax.random.PRNGKey(0)
    kx, k1, k2, k3, k4 = jax.random.split(key, 5)

    B = 700  # non-multiple of TB: exercises multi-tile grid + batch padding
    x = jax.random.normal(kx, (B, 9), jnp.float32)

    params = (
        init_linear(k1, 9, 64),
        init_linear(k2, 64, 256),
        init_linear(k3, 256, 64),
        init_linear(k4, 64, 1),
    )

    out = simple_convnet_forward(x, params)
    out = jax.block_until_ready(out)

    ref = reference_forward(x, params)
    assert out.shape == (B, 1), out.shape
    assert jnp.allclose(out, ref, atol=1e-2, rtol=1e-2), "mismatch vs reference"

    print("KERNEL_OK")
</pallas_src>

<mosaic_0001>
module attributes {stable_mosaic.version = 11 : i64} {
  func.func @mlp_kernel(%arg0: i32, %arg1: memref<16x512xbf16, #tpu.memory_space<vmem>>, %arg2: memref<64x16xbf16, #tpu.memory_space<vmem>>, %arg3: memref<64x1xf32, #tpu.memory_space<vmem>>, %arg4: memref<256x64xbf16, #tpu.memory_space<vmem>>, %arg5: memref<256x1xf32, #tpu.memory_space<vmem>>, %arg6: memref<64x256xbf16, #tpu.memory_space<vmem>>, %arg7: memref<64x1xf32, #tpu.memory_space<vmem>>, %arg8: memref<64x1xf32, #tpu.memory_space<vmem>>, %arg9: memref<1x1xf32, #tpu.memory_space<vmem>>, %arg10: memref<1x512xf32, #tpu.memory_space<vmem>>) attributes {dimension_semantics = [#tpu.dimension_semantics<parallel>], iteration_bounds = array<i64: 2>, scalar_prefetch = 0 : i64, scratch_operands = 0 : i64, tpu.core_type = #tpu.core_type<tc>, window_params = [{transform_indices = @transform_0, window_bounds = array<i64: 16, 512>}, {pipeline_mode = #tpu.pipeline_mode<synchronous>, transform_indices = @transform_1, window_bounds = array<i64: 64, 16>}, {pipeline_mode = #tpu.pipeline_mode<synchronous>, transform_indices = @transform_2, window_bounds = array<i64: 64, 1>}, {pipeline_mode = #tpu.pipeline_mode<synchronous>, transform_indices = @transform_3, window_bounds = array<i64: 256, 64>}, {pipeline_mode = #tpu.pipeline_mode<synchronous>, transform_indices = @transform_4, window_bounds = array<i64: 256, 1>}, {pipeline_mode = #tpu.pipeline_mode<synchronous>, transform_indices = @transform_5, window_bounds = array<i64: 64, 256>}, {pipeline_mode = #tpu.pipeline_mode<synchronous>, transform_indices = @transform_6, window_bounds = array<i64: 64, 1>}, {pipeline_mode = #tpu.pipeline_mode<synchronous>, transform_indices = @transform_7, window_bounds = array<i64: 64, 1>}, {pipeline_mode = #tpu.pipeline_mode<synchronous>, transform_indices = @transform_8, window_bounds = array<i64: 1, 1>}, {transform_indices = @transform_9, window_bounds = array<i64: 1, 512>}]} {
    %c0 = arith.constant 0 : index
    %c0_0 = arith.constant 0 : index
    %0 = vector.load %arg2[%c0, %c0_0] : memref<64x16xbf16, #tpu.memory_space<vmem>>, vector<64x16xbf16>
    %c0_1 = arith.constant 0 : index
    %c0_2 = arith.constant 0 : index
    %1 = vector.load %arg1[%c0_1, %c0_2] : memref<16x512xbf16, #tpu.memory_space<vmem>>, vector<16x512xbf16>
    %cst = arith.constant dense<0.000000e+00> : vector<64x512xf32>
    %2 = tpu.matmul %0, %1, %cst {dimension_numbers = #tpu.dot_dimension_numbers<[1], [0], [0], [1], [0, 0, 1, 1], [], []>} : vector<64x16xbf16>, vector<16x512xbf16>, vector<64x512xf32> -> vector<64x512xf32>
    %c0_3 = arith.constant 0 : index
    %c0_4 = arith.constant 0 : index
    %3 = vector.load %arg3[%c0_3, %c0_4] : memref<64x1xf32, #tpu.memory_space<vmem>>, vector<64x1xf32>
    %4 = vector.broadcast %3 : vector<64x1xf32> to vector<64x512xf32>
    %5 = arith.addf %2, %4 : vector<64x512xf32>
    %cst_5 = arith.constant 0.000000e+00 : f32
    %6 = vector.broadcast %cst_5 : f32 to vector<64x512xf32>
    %7 = arith.maximumf %5, %6 : vector<64x512xf32>
    %c0_6 = arith.constant 0 : index
    %c0_7 = arith.constant 0 : index
    %8 = vector.load %arg4[%c0_6, %c0_7] : memref<256x64xbf16, #tpu.memory_space<vmem>>, vector<256x64xbf16>
    %9 = arith.truncf %7 : vector<64x512xf32> to vector<64x512xbf16>
    %cst_8 = arith.constant dense<0.000000e+00> : vector<256x512xf32>
    %10 = tpu.matmul %8, %9, %cst_8 {dimension_numbers = #tpu.dot_dimension_numbers<[1], [0], [0], [1], [0, 0, 1, 1], [], []>} : vector<256x64xbf16>, vector<64x512xbf16>, vector<256x512xf32> -> vector<256x512xf32>
    %c0_9 = arith.constant 0 : index
    %c0_10 = arith.constant 0 : index
    %11 = vector.load %arg5[%c0_9, %c0_10] : memref<256x1xf32, #tpu.memory_space<vmem>>, vector<256x1xf32>
    %12 = vector.broadcast %11 : vector<256x1xf32> to vector<256x512xf32>
    %13 = arith.addf %10, %12 : vector<256x512xf32>
    %cst_11 = arith.constant 0.000000e+00 : f32
    %14 = vector.broadcast %cst_11 : f32 to vector<256x512xf32>
    %15 = arith.maximumf %13, %14 : vector<256x512xf32>
    %c0_12 = arith.constant 0 : index
    %c0_13 = arith.constant 0 : index
    %16 = vector.load %arg6[%c0_12, %c0_13] : memref<64x256xbf16, #tpu.memory_space<vmem>>, vector<64x256xbf16>
    %17 = arith.truncf %15 : vector<256x512xf32> to vector<256x512xbf16>
    %cst_14 = arith.constant dense<0.000000e+00> : vector<64x512xf32>
    %18 = tpu.matmul %16, %17, %cst_14 {dimension_numbers = #tpu.dot_dimension_numbers<[1], [0], [0], [1], [0, 0, 1, 1], [], []>} : vector<64x256xbf16>, vector<256x512xbf16>, vector<64x512xf32> -> vector<64x512xf32>
    %c0_15 = arith.constant 0 : index
    %c0_16 = arith.constant 0 : index
    %19 = vector.load %arg7[%c0_15, %c0_16] : memref<64x1xf32, #tpu.memory_space<vmem>>, vector<64x1xf32>
    %20 = vector.broadcast %19 : vector<64x1xf32> to vector<64x512xf32>
    %21 = arith.addf %18, %20 : vector<64x512xf32>
    %cst_17 = arith.constant 0.000000e+00 : f32
    %22 = vector.broadcast %cst_17 : f32 to vector<64x512xf32>
    %23 = arith.maximumf %21, %22 : vector<64x512xf32>
    %c0_18 = arith.constant 0 : index
    %c0_19 = arith.constant 0 : index
    %24 = vector.load %arg8[%c0_18, %c0_19] : memref<64x1xf32, #tpu.memory_space<vmem>>, vector<64x1xf32>
    %25 = vector.broadcast %24 : vector<64x1xf32> to vector<64x512xf32>
    %26 = arith.mulf %23, %25 : vector<64x512xf32>
    %cst_20 = arith.constant dense<0.000000e+00> : vector<512xf32>
    %27 = vector.multi_reduction <add>, %26, %cst_20 [0] : vector<64x512xf32> to vector<512xf32>
    %28 = vector.shape_cast %27 : vector<512xf32> to vector<1x512xf32>
    %c0_21 = arith.constant 0 : index
    %c0_22 = arith.constant 0 : index
    %29 = vector.load %arg9[%c0_21, %c0_22] : memref<1x1xf32, #tpu.memory_space<vmem>>, vector<1x1xf32>
    %30 = vector.broadcast %29 : vector<1x1xf32> to vector<1x512xf32>
    %31 = arith.addf %28, %30 : vector<1x512xf32>
    %c0_23 = arith.constant 0 : index
    %c0_24 = arith.constant 0 : index
    %32 = vector.load %arg10[%c0_23, %c0_24] : memref<1x512xf32, #tpu.memory_space<vmem>>, vector<1x512xf32>
    tpu.vector_store %arg10[%c0_23, %c0_24], %31 {strides = array<i32>} : memref<1x512xf32, #tpu.memory_space<vmem>>, vector<1x512xf32>,
    return
  }
  func.func @transform_0(%arg0: i32) -> (i32, i32) {
    %c0_i32 = arith.constant 0 : i32
    %c0_i32_0 = arith.constant 0 : i32
    return %c0_i32, %arg0 : i32, i32
  }
  func.func @transform_1(%arg0: i32) -> (i32, i32) {
    %c0_i32 = arith.constant 0 : i32
    %c0_i32_0 = arith.constant 0 : i32
    %c0_i32_1 = arith.constant 0 : i32
    return %c0_i32, %c0_i32_0 : i32, i32
  }
  func.func @transform_2(%arg0: i32) -> (i32, i32) {
    %c0_i32 = arith.constant 0 : i32
    %c0_i32_0 = arith.constant 0 : i32
    %c0_i32_1 = arith.constant 0 : i32
    return %c0_i32, %c0_i32_0 : i32, i32
  }
  func.func @transform_3(%arg0: i32) -> (i32, i32) {
    %c0_i32 = arith.constant 0 : i32
    %c0_i32_0 = arith.constant 0 : i32
    %c0_i32_1 = arith.constant 0 : i32
    return %c0_i32, %c0_i32_0 : i32, i32
  }
  func.func @transform_4(%arg0: i32) -> (i32, i32) {
    %c0_i32 = arith.constant 0 : i32
    %c0_i32_0 = arith.constant 0 : i32
    %c0_i32_1 = arith.constant 0 : i32
    return %c0_i32, %c0_i32_0 : i32, i32
  }
  func.func @transform_5(%arg0: i32) -> (i32, i32) {
    %c0_i32 = arith.constant 0 : i32
    %c0_i32_0 = arith.constant 0 : i32
    %c0_i32_1 = arith.constant 0 : i32
    return %c0_i32, %c0_i32_0 : i32, i32
  }
  func.func @transform_6(%arg0: i32) -> (i32, i32) {
    %c0_i32 = arith.constant 0 : i32
    %c0_i32_0 = arith.constant 0 : i32
    %c0_i32_1 = arith.constant 0 : i32
    return %c0_i32, %c0_i32_0 : i32, i32
  }
  func.func @transform_7(%arg0: i32) -> (i32, i32) {
    %c0_i32 = arith.constant 0 : i32
    %c0_i32_0 = arith.constant 0 : i32
    %c0_i32_1 = arith.constant 0 : i32
    return %c0_i32, %c0_i32_0 : i32, i32
  }
  func.func @transform_8(%arg0: i32) -> (i32, i32) {
    %c0_i32 = arith.constant 0 : i32
    %c0_i32_0 = arith.constant 0 : i32
    %c0_i32_1 = arith.constant 0 : i32
    return %c0_i32, %c0_i32_0 : i32, i32
  }
  func.func @transform_9(%arg0: i32) -> (i32, i32) {
    %c0_i32 = arith.constant 0 : i32
    %c0_i32_0 = arith.constant 0 : i32
    return %c0_i32, %arg0 : i32, i32
  }
}

</mosaic_0001>

<llo_original>
// kernel: tpu_custom_call.1
$region0: #{tpu_custom_call.1}
  #allocation0 [shape = 'u32[]', space=smem, size = 0x4, offset = 0x4, fixed_abs, tag = 'smem constant byte address 0x4 - core index']
  #allocation1 [shape = 'u32[144,128]{1,0:T(1,128)}', space=vmem, size = 0x12000, scoped, tag = 'internal scratch']
  #allocation2 [shape = 'f32[1,1]{1,0:T(1,128)S(1)}', space=vmem, size = 0x200, scoped, tag = 'scoped memory for tpu_custom_call.1']
  %s0 = inlined_call_operand.vmem [shape: bf16[16,1024], index: 0, kind: input, shape index: {}]
  %s1 = inlined_call_operand.vmem [shape: bf16[64,16], index: 1, kind: input, shape index: {}]
  %s2 = inlined_call_operand.vmem [shape: f32[64,1], index: 2, kind: input, shape index: {}]
  %s3 = inlined_call_operand.vmem [shape: bf16[256,64], index: 3, kind: input, shape index: {}]
  %s4 = inlined_call_operand.vmem [shape: f32[256,1], index: 4, kind: input, shape index: {}]
  %s5 = inlined_call_operand.vmem [shape: bf16[64,256], index: 5, kind: input, shape index: {}]
  %s6 = inlined_call_operand.vmem [shape: f32[64,1], index: 6, kind: input, shape index: {}]
  %s7 = inlined_call_operand.vmem [shape: f32[64,1], index: 7, kind: input, shape index: {}]
  %s8 = inlined_call_operand.<no memory space> [shape: f32[1,1], index: 8, kind: input, shape index: {}]
  %s9 = inlined_call_operand.hbm [shape: f32[1,1024], index: 9, kind: output, shape index: {}]
  %s10 = sld [smem:[#allocation0]]
  $region92: #{tpu_custom_call.1} parent=0
    _
  %s12 = ssub.s32 1, %s10
  %s13 = scalar_select 0, %s12, %s10
  %v14 = vstv %s8
  %15 = vst [vmem:[#allocation2] sm:$0x1] %v14
  $region1: #{tpu_custom_call.1} parent=0
    #allocation3 [shape = 'u8[32768]{0}', space=vmem, size = 0x8000, scoped, tag = 'input window, operand 0']
    #allocation4 [shape = 'u8[4096]{0}', space=vmem, size = 0x1000, scoped, tag = 'output window, operand 0']
    #allocation5 [shape = 's32[2]{0}', space=sflag, size = 0x8, scoped, tag = 'scoped memory for tpu_custom_call.1']
    %16 = vsyncpa [#allocation5], 0
    %s17 = scalar_lea.sflag [#allocation5], 1
    %18 = vsyncpa %s17, 0
    loop: start=0, step=1, limit=4
    $region2: #{tpu_custom_call.1} parent=1 // loop_pre_header
      _
    $region3: #{tpu_custom_call.1} parent=1 // loop_header
      %s20 = sphi 0, %s24
      %p21 = scmp.ge.s32.totalorder %s20, 4
      %s30 = sphi 0, %s32
      %s33 = sphi 0, %s30
      %s34 = sphi 0, %s33
      %s50 = sphi 0, %s34
      %s54 = sphi 0, %s54
      %s56 = sphi 0, %s54
      %s57 = sphi 0, %s56
      %s71 = sphi 0, %s57
      %s75 = sphi 0, %s75
      %s77 = sphi 0, %s75
      %s78 = sphi 0, %s77
      %s92 = sphi 0, %s78
      %s96 = sphi 0, %s96
      %s98 = sphi 0, %s96
      %s99 = sphi 0, %s98
      %s113 = sphi 0, %s99
      %s117 = sphi 0, %s117
      %s119 = sphi 0, %s117
      %s120 = sphi 0, %s119
      %s134 = sphi 0, %s120
      %s138 = sphi 0, %s138
      %s140 = sphi 0, %s138
      %s141 = sphi 0, %s140
      %s155 = sphi 0, %s141
      %s159 = sphi 0, %s159
      %s161 = sphi 0, %s159
      %s162 = sphi 0, %s161
      %s176 = sphi 0, %s162
      %s180 = sphi 0, %s180
      %s182 = sphi 0, %s180
      %s183 = sphi 0, %s182
      %s197 = sphi 0, %s183
      %s201 = sphi 0, %s201
      %s203 = sphi 0, %s201
      %s204 = sphi 0, %s203
      %s218 = sphi 0, %s204
      %s224 = sphi 0, %s226
      %s227 = sphi 0, %s224
      %s228 = sphi 0, %s227
      %s244 = sphi 0, %s228
    $region4: #{tpu_custom_call.1} parent=1 // loop_header_branch
      %23 = sbr.rel (%p21) target = $region8
    $region5: #{tpu_custom_call.1} parent=1 // loop_body
      %s25 = ssub.s32 %s20, 1
      %s26 = ssub.s32 %s20, 2
      %s27 = sadd.s32 %s20, 1
      %s28 = ssub.s32 %s20, %s27
      %p29 = scmp.eq.s32.totalorder %s28, 0
      %s31 = sadd.s32 %s30, 1
      %s32 = scalar_select %p29, %s30, %s31
      %p35 = pneg %p29
      %p36 = scmp.eq.s32.totalorder %s20, 1
      %p37 = por %p35, %p36
      %p38 = scmp.ne.s32.totalorder %s30, %s33
      %p39 = scmp.eq.s32.totalorder %s20, 0
      %p40 = por %p38, %p39
      %p41 = scmp.ne.s32.totalorder %s30, %s33
      %p42 = scmp.eq.s32.totalorder %s25, 1
      %p43 = por %p41, %p42
      %p44 = scmp.ne.s32.totalorder %s33, %s34
      %p45 = scmp.eq.s32.totalorder %s25, 0
      %p46 = por %p44, %p45
      %p47 = scmp.ne.s32.totalorder %s33, %s34
      %p48 = scmp.eq.s32.totalorder %s26, 1
      %p49 = por %p47, %p48
      %p51 = scmp.ne.s32.totalorder %s34, %s50
      %p52 = scmp.eq.s32.totalorder %s26, 0
      %p53 = por %p51, %p52
      %s55 = sadd.s32 %s54, 1
      %p58 = scmp.eq.s32.totalorder %s20, 1
      %p59 = scmp.ne.s32.totalorder %s54, %s56
      %p60 = scmp.eq.s32.totalorder %s20, 0
      %p61 = por %p59, %p60
      %p62 = scmp.ne.s32.totalorder %s54, %s56
      %p63 = scmp.eq.s32.totalorder %s25, 1
      %p64 = por %p62, %p63
      %p65 = scmp.ne.s32.totalorder %s56, %s57
      %p66 = scmp.eq.s32.totalorder %s25, 0
      %p67 = por %p65, %p66
      %p68 = scmp.ne.s32.totalorder %s56, %s57
      %p69 = scmp.eq.s32.totalorder %s26, 1
      %p70 = por %p68, %p69
      %p72 = scmp.ne.s32.totalorder %s57, %s71
      %p73 = scmp.eq.s32.totalorder %s26, 0
      %p74 = por %p72, %p73
      %s76 = sadd.s32 %s75, 1
      %p79 = scmp.eq.s32.totalorder %s20, 1
      %p80 = scmp.ne.s32.totalorder %s75, %s77
      %p81 = scmp.eq.s32.totalorder %s20, 0
      %p82 = por %p80, %p81
      %p83 = scmp.ne.s32.totalorder %s75, %s77
      %p84 = scmp.eq.s32.totalorder %s25, 1
      %p85 = por %p83, %p84
      %p86 = scmp.ne.s32.totalorder %s77, %s78
      %p87 = scmp.eq.s32.totalorder %s25, 0
      %p88 = por %p86, %p87
      %p89 = scmp.ne.s32.totalorder %s77, %s78
      %p90 = scmp.eq.s32.totalorder %s26, 1
      %p91 = por %p89, %p90
      %p93 = scmp.ne.s32.totalorder %s78, %s92
      %p94 = scmp.eq.s32.totalorder %s26, 0
      %p95 = por %p93, %p94
      %s97 = sadd.s32 %s96, 1
      %p100 = scmp.eq.s32.totalorder %s20, 1
      %p101 = scmp.ne.s32.totalorder %s96, %s98
      %p102 = scmp.eq.s32.totalorder %s20, 0
      %p103 = por %p101, %p102
      %p104 = scmp.ne.s32.totalorder %s96, %s98
      %p105 = scmp.eq.s32.totalorder %s25, 1
      %p106 = por %p104, %p105
      %p107 = scmp.ne.s32.totalorder %s98, %s99
      %p108 = scmp.eq.s32.totalorder %s25, 0
      %p109 = por %p107, %p108
      %p110 = scmp.ne.s32.totalorder %s98, %s99
      %p111 = scmp.eq.s32.totalorder %s26, 1
      %p112 = por %p110, %p111
      %p114 = scmp.ne.s32.totalorder %s99, %s113
      %p115 = scmp.eq.s32.totalorder %s26, 0
      %p116 = por %p114, %p115
      %s118 = sadd.s32 %s117, 1
      %p121 = scmp.eq.s32.totalorder %s20, 1
      %p122 = scmp.ne.s32.totalorder %s117, %s119
      %p123 = scmp.eq.s32.totalorder %s20, 0
      %p124 = por %p122, %p123
      %p125 = scmp.ne.s32.totalorder %s117, %s119
      %p126 = scmp.eq.s32.totalorder %s25, 1
      %p127 = por %p125, %p126
      %p128 = scmp.ne.s32.totalorder %s119, %s120
      %p129 = scmp.eq.s32.totalorder %s25, 0
      %p130 = por %p128, %p129
      %p131 = scmp.ne.s32.totalorder %s119, %s120
      %p132 = scmp.eq.s32.totalorder %s26, 1
      %p133 = por %p131, %p132
      %p135 = scmp.ne.s32.totalorder %s120, %s134
      %p136 = scmp.eq.s32.totalorder %s26, 0
      %p137 = por %p135, %p136
      %s139 = sadd.s32 %s138, 1
      %p142 = scmp.eq.s32.totalorder %s20, 1
      %p143 = scmp.ne.s32.totalorder %s138, %s140
      %p144 = scmp.eq.s32.totalorder %s20, 0
      %p145 = por %p143, %p144
      %p146 = scmp.ne.s32.totalorder %s138, %s140
      %p147 = scmp.eq.s32.totalorder %s25, 1
      %p148 = por %p146, %p147
      %p149 = scmp.ne.s32.totalorder %s140, %s141
      %p150 = scmp.eq.s32.totalorder %s25, 0
      %p151 = por %p149, %p150
      %p152 = scmp.ne.s32.totalorder %s140, %s141
      %p153 = scmp.eq.s32.totalorder %s26, 1
      %p154 = por %p152, %p153
      %p156 = scmp.ne.s32.totalorder %s141, %s155
      %p157 = scmp.eq.s32.totalorder %s26, 0
      %p158 = por %p156, %p157
      %s160 = sadd.s32 %s159, 1
      %p163 = scmp.eq.s32.totalorder %s20, 1
      %p164 = scmp.ne.s32.totalorder %s159, %s161
      %p165 = scmp.eq.s32.totalorder %s20, 0
      %p166 = por %p164, %p165
      %p167 = scmp.ne.s32.totalorder %s159, %s161
      %p168 = scmp.eq.s32.totalorder %s25, 1
      %p169 = por %p167, %p168
      %p170 = scmp.ne.s32.totalorder %s161, %s162
      %p171 = scmp.eq.s32.totalorder %s25, 0
      %p172 = por %p170, %p171
      %p173 = scmp.ne.s32.totalorder %s161, %s162
      %p174 = scmp.eq.s32.totalorder %s26, 1
      %p175 = por %p173, %p174
      %p177 = scmp.ne.s32.totalorder %s162, %s176
      %p178 = scmp.eq.s32.totalorder %s26, 0
      %p179 = por %p177, %p178
      %s181 = sadd.s32 %s180, 1
      %p184 = scmp.eq.s32.totalorder %s20, 1
      %p185 = scmp.ne.s32.totalorder %s180, %s182
      %p186 = scmp.eq.s32.totalorder %s20, 0
      %p187 = por %p185, %p186
      %p188 = scmp.ne.s32.totalorder %s180, %s182
      %p189 = scmp.eq.s32.totalorder %s25, 1
      %p190 = por %p188, %p189
      %p191 = scmp.ne.s32.totalorder %s182, %s183
      %p192 = scmp.eq.s32.totalorder %s25, 0
      %p193 = por %p191, %p192
      %p194 = scmp.ne.s32.totalorder %s182, %s183
      %p195 = scmp.eq.s32.totalorder %s26, 1
      %p196 = por %p194, %p195
      %p198 = scmp.ne.s32.totalorder %s183, %s197
      %p199 = scmp.eq.s32.totalorder %s26, 0
      %p200 = por %p198, %p199
      %s202 = sadd.s32 %s201, 1
      %p205 = scmp.eq.s32.totalorder %s20, 1
      %p206 = scmp.ne.s32.totalorder %s201, %s203
      %p207 = scmp.eq.s32.totalorder %s20, 0
      %p208 = por %p206, %p207
      %p209 = scmp.ne.s32.totalorder %s201, %s203
      %p210 = scmp.eq.s32.totalorder %s25, 1
      %p211 = por %p209, %p210
      %p212 = scmp.ne.s32.totalorder %s203, %s204
      %p213 = scmp.eq.s32.totalorder %s25, 0
      %p214 = por %p212, %p213
      %p215 = scmp.ne.s32.totalorder %s203, %s204
      %p216 = scmp.eq.s32.totalorder %s26, 1
      %p217 = por %p215, %p216
      %p219 = scmp.ne.s32.totalorder %s204, %s218
      %p220 = scmp.eq.s32.totalorder %s26, 0
      %p221 = por %p219, %p220
      %s222 = ssub.s32 %s20, %s27
      %p223 = scmp.eq.s32.totalorder %s222, 0
      %s225 = sadd.s32 %s224, 1
      %s226 = scalar_select %p223, %s224, %s225
      %p229 = pneg %p223
      %p230 = scmp.eq.s32.totalorder %s20, 1
      %p231 = por %p229, %p230
      %p232 = scmp.ne.s32.totalorder %s224, %s227
      %p233 = scmp.eq.s32.totalorder %s20, 0
      %p234 = por %p232, %p233
      %p235 = scmp.ne.s32.totalorder %s224, %s227
      %p236 = scmp.eq.s32.totalorder %s25, 1
      %p237 = por %p235, %p236
      %p238 = scmp.ne.s32.totalorder %s227, %s228
      %p239 = scmp.eq.s32.totalorder %s25, 0
      %p240 = por %p238, %p239
      %p241 = scmp.ne.s32.totalorder %s227, %s228
      %p242 = scmp.eq.s32.totalorder %s26, 1
      %p243 = por %p241, %p242
      %p245 = scmp.ne.s32.totalorder %s228, %s244
      %p246 = scmp.eq.s32.totalorder %s26, 0
      %p247 = por %p245, %p246
      %p248 = scmp.le.s32.totalorder 1, %s20
      %p249 = scmp.lt.s32.totalorder %s20, 3
      %p250 = pnand %p248, %p249
      %p251 = pneg %p250
      // Predicated region
      $region9: #{tpu_custom_call.1} parent=5 // pred_check
        _
      $region10: #{tpu_custom_call.1} parent=5 // pred_check_branch
        %253 = sbr.rel (%p250) target = $region12
      $region11: #{tpu_custom_call.1} parent=5 // pred_region
        %s254 = ssub.s32 %s20, 1
        // Predicated region
        $region13: #{tpu_custom_call.1} parent=11 // pred_check
          %p255 = pneg %p67
        $region14: #{tpu_custom_call.1} parent=11 // pred_check_branch
          %257 = sbr.rel (%p255) target = $region16
        $region15: #{tpu_custom_call.1} parent=11 // pred_region
          _
        $region16: #{tpu_custom_call.1} parent=11 // pred_fallthru
          _
        // Predicated region
        $region17: #{tpu_custom_call.1} parent=11 // pred_check
          %p258 = pneg %p88
        $region18: #{tpu_custom_call.1} parent=11 // pred_check_branch
          %260 = sbr.rel (%p258) target = $region20
        $region19: #{tpu_custom_call.1} parent=11 // pred_region
          _
        $region20: #{tpu_custom_call.1} parent=11 // pred_fallthru
          _
        // Predicated region
        $region21: #{tpu_custom_call.1} parent=11 // pred_check
          %p261 = pneg %p109
        $region22: #{tpu_custom_call.1} parent=11 // pred_check_branch
          %263 = sbr.rel (%p261) target = $region24
        $region23: #{tpu_custom_call.1} parent=11 // pred_region
          _
        $region24: #{tpu_custom_call.1} parent=11 // pred_fallthru
          _
        // Predicated region
        $region25: #{tpu_custom_call.1} parent=11 // pred_check
          %p264 = pneg %p130
        $region26: #{tpu_custom_call.1} parent=11 // pred_check_branch
          %266 = sbr.rel (%p264) target = $region28
        $region27: #{tpu_custom_call.1} parent=11 // pred_region
          _
        $region28: #{tpu_custom_call.1} parent=11 // pred_fallthru
          _
        // Predicated region
        $region29: #{tpu_custom_call.1} parent=11 // pred_check
          %p267 = pneg %p151
        $region30: #{tpu_custom_call.1} parent=11 // pred_check_branch
          %269 = sbr.rel (%p267) target = $region32
        $region31: #{tpu_custom_call.1} parent=11 // pred_region
          _
        $region32: #{tpu_custom_call.1} parent=11 // pred_fallthru
          _
        // Predicated region
        $region33: #{tpu_custom_call.1} parent=11 // pred_check
          %p270 = pneg %p172
        $region34: #{tpu_custom_call.1} parent=11 // pred_check_branch
          %272 = sbr.rel (%p270) target = $region36
        $region35: #{tpu_custom_call.1} parent=11 // pred_region
          _
        $region36: #{tpu_custom_call.1} parent=11 // pred_fallthru
          _
        // Predicated region
        $region37: #{tpu_custom_call.1} parent=11 // pred_check
          %p273 = pneg %p193
        $region38: #{tpu_custom_call.1} parent=11 // pred_check_branch
          %275 = sbr.rel (%p273) target = $region40
        $region39: #{tpu_custom_call.1} parent=11 // pred_region
          _
        $region40: #{tpu_custom_call.1} parent=11 // pred_fallthru
          _
        // Predicated region
        $region41: #{tpu_custom_call.1} parent=11 // pred_check
          %p276 = pneg %p214
        $region42: #{tpu_custom_call.1} parent=11 // pred_check_branch
          %278 = sbr.rel (%p276) target = $region44
        $region43: #{tpu_custom_call.1} parent=11 // pred_region
          _
        $region44: #{tpu_custom_call.1} parent=11 // pred_fallthru
          _
      $region12: #{tpu_custom_call.1} parent=5 // pred_fallthru
        _
      %p279 = scmp.lt.s32.totalorder %s20, 2
      // Predicated region
      $region45: #{tpu_custom_call.1} parent=5 // pred_check
        %p280 = pneg %p279
      $region46: #{tpu_custom_call.1} parent=5 // pred_check_branch
        %282 = sbr.rel (%p280) target = $region48
      $region47: #{tpu_custom_call.1} parent=5 // pred_region
        // Predicated region
        $region49: #{tpu_custom_call.1} parent=47 // pred_check
          %p283 = pneg %p40
        $region50: #{tpu_custom_call.1} parent=47 // pred_check_branch
          %285 = sbr.rel (%p283) target = $region52
        $region51: #{tpu_custom_call.1} parent=47 // pred_region
          %s286 = sand.u32 %s30, 1
          %s287 = sand.u32 %s30, 1
          %s288 = smul.addr %s287, 32
          %s289 = scalar_lea.vmem [#allocation3], %s288
          %s290 = smul.u32 4, %s20
          %s291 = smul.addr %s290, 4
          %s292 = scalar_lea.vmem %s0, %s291
          // Predicated region
          $region53: #{tpu_custom_call.1} parent=51 // pred_check
            _
          $region54: #{tpu_custom_call.1} parent=51 // pred_check_branch
            %294 = sbr.rel (0) target = $region56
          $region55: #{tpu_custom_call.1} parent=51 // pred_region
            // Predicated region
            $region57: #{tpu_custom_call.1} parent=55 // pred_check
              _
            $region58: #{tpu_custom_call.1} parent=55 // pred_check_branch
              %296 = sbr.rel (0) target = $region60
            $region59: #{tpu_custom_call.1} parent=55 // pred_region
              loop: start=0, step=1, limit=1
              $region61: #{tpu_custom_call.1} parent=59 // loop_pre_header
                _
              $region62: #{tpu_custom_call.1} parent=59 // loop_header
                %s298 = sphi 0, %s302
                %p299 = scmp.ge.s32.totalorder %s298, 1
                %s303 = sphi %s292, %s292
                %s304 = sphi %s289, %s289
              $region63: #{tpu_custom_call.1} parent=59 // loop_header_branch
                %301 = sbr.rel (%p299) target = $region67
              $region64: #{tpu_custom_call.1} parent=59 // loop_body
                %v305 = vld [vmem:[%s303] sm:$0xff]
                %306 = vst [vmem:[%s304] sm:$0xff] %v305
                %v307 = vld [vmem:[%s303 + $0x8] sm:$0xff]
                %308 = vst [vmem:[%s304 + $0x8] sm:$0xff] %v307
                %v309 = vld [vmem:[%s303 + $0x20] sm:$0xff]
                %310 = vst [vmem:[%s304 + $0x10] sm:$0xff] %v309
                %v311 = vld [vmem:[%s303 + $0x28] sm:$0xff]
                %312 = vst [vmem:[%s304 + $0x18] sm:$0xff] %v311
              $region65: #{tpu_custom_call.1} parent=59 // loop_footer
                %s302 = sadd.s32 1, %s298
              $region66: #{tpu_custom_call.1} parent=59 // loop_footer_branch
                %297 = sbr.rel target = $region62
              $region67: #{tpu_custom_call.1} parent=59 // loop_exit
                _
            $region60: #{tpu_custom_call.1} parent=55 // pred_fallthru
              _
            // Predicated region
            $region68: #{tpu_custom_call.1} parent=55 // pred_check
              _
            $region69: #{tpu_custom_call.1} parent=55 // pred_check_branch
              %314 = sbr.rel target = $region71
            $region70: #{tpu_custom_call.1} parent=55 // pred_region
              _
            $region71: #{tpu_custom_call.1} parent=55 // pred_fallthru
              _
          $region56: #{tpu_custom_call.1} parent=51 // pred_fallthru
            _
          %315 = vnop
        $region52: #{tpu_custom_call.1} parent=47 // pred_fallthru
          _
      $region48: #{tpu_custom_call.1} parent=5 // pred_fallthru
        _
      %p316 = scmp.le.s32.totalorder 1, %s20
      %p317 = scmp.lt.s32.totalorder %s20, 3
      %p318 = pnand %p316, %p317
      %p319 = pneg %p318
      // Predicated region
      $region72: #{tpu_custom_call.1} parent=5 // pred_check
        _
      $region73: #{tpu_custom_call.1} parent=5 // pred_check_branch
        %321 = sbr.rel (%p318) target = $region75
      $region74: #{tpu_custom_call.1} parent=5 // pred_region
        %s322 = ssub.s32 %s20, 1
        %s323 = sand.u32 %s33, 1
        %s324 = sand.u32 %s33, 1
        %s325 = smul.addr %s324, 32
        %s326 = scalar_lea.vmem [#allocation3], %s325
        // Predicated region
        $region76: #{tpu_custom_call.1} parent=74 // pred_check
          %p327 = pneg %p46
        $region77: #{tpu_custom_call.1} parent=74 // pred_check_branch
          %329 = sbr.rel (%p327) target = $region79
        $region78: #{tpu_custom_call.1} parent=74 // pred_region
          _
        $region79: #{tpu_custom_call.1} parent=74 // pred_fallthru
          _
        %s330 = sand.u32 %s33, 1
        %s331 = sand.u32 %s33, 1
        %s332 = smul.addr %s331, 32
        %s333 = scalar_lea.vmem [#allocation3], %s332
        %p334 = pneg %p46
        %p335 = pneg %p43
        %p336 = pneg %p67
        %p337 = pneg %p64
        %p338 = pneg %p88
        %p339 = pneg %p85
        %p340 = pneg %p109
        %p341 = pneg %p106
        %p342 = pneg %p130
        %p343 = pneg %p127
        %p344 = pneg %p151
        %p345 = pneg %p148
        %p346 = pneg %p172
        %p347 = pneg %p169
        %p348 = pneg %p193
        %p349 = pneg %p190
        %p350 = pneg %p214
        %p351 = pneg %p211
        %p352 = pneg %p240
        %p353 = pneg %p237
        %s354 = sand.u32 %s227, 1
        %s355 = scalar_lea.sflag [#allocation5], %s354
        %s356 = sand.u32 %s227, 1
        %s357 = smul.addr %s356, 4
        %s358 = scalar_lea.vmem [#allocation4], %s357
        %s359 = smul.u32 4, %s25
        %s360 = smul.u32 4, %s25
        %v362 = vld [vmem:[%s1] sm:$0xf]
        %v363 = vld [vmem:[%s1 + $0x4] sm:$0xf]
        %v364 = vld [vmem:[%s1 + $0x8] sm:$0xf]
        %v365 = vld [vmem:[%s1 + $0xc] sm:$0xf]
        %v366 = vld [vmem:[%s1 + $0x10] sm:$0xf]
        %v367 = vld [vmem:[%s1 + $0x14] sm:$0xf]
        %v368 = vld [vmem:[%s1 + $0x18] sm:$0xf]
        %v369 = vld [vmem:[%s1 + $0x1c] sm:$0xf]
        %v370 = vld [vmem:[%s326] sm:$0xff]
        %v371 = vld [vmem:[%s326 + $0x8] sm:$0xff]
        %v372 = vld [vmem:[%s326 + $0x10] sm:$0xff]
        %v373 = vld [vmem:[%s326 + $0x18] sm:$0xff]
        %v374 = vld [vmem:[%s2] sm:$0xff]
        %v375 = vld [vmem:[%s2 + $0x8] sm:$0xff]
        %v376 = vld [vmem:[%s2 + $0x10] sm:$0xff]
        %v377 = vld [vmem:[%s2 + $0x18] sm:$0xff]
        %v378 = vld [vmem:[%s2 + $0x20] sm:$0xff]
        %v379 = vld [vmem:[%s2 + $0x28] sm:$0xff]
        %v380 = vld [vmem:[%s2 + $0x30] sm:$0xff]
        %v381 = vld [vmem:[%s2 + $0x38] sm:$0xff]
        %383 = vset.pattern.permute.xlu0 0
        %384 = vperm.xlu0 %383, %v374
        %v385 = vpop.permute.xlu0 %384
        %388 = vset.pattern.permute.xlu0 0
        %389 = vperm.xlu0 %388, %v375
        %v390 = vpop.permute.xlu0 %389
        %393 = vset.pattern.permute.xlu0 0
        %394 = vperm.xlu0 %393, %v376
        %v395 = vpop.permute.xlu0 %394
        %398 = vset.pattern.permute.xlu0 0
        %399 = vperm.xlu0 %398, %v377
        %v400 = vpop.permute.xlu0 %399
        %403 = vset.pattern.permute.xlu0 0
        %404 = vperm.xlu0 %403, %v378
        %v405 = vpop.permute.xlu0 %404
        %408 = vset.pattern.permute.xlu0 0
        %409 = vperm.xlu0 %408, %v379
        %v410 = vpop.permute.xlu0 %409
        %413 = vset.pattern.permute.xlu0 0
        %414 = vperm.xlu0 %413, %v380
        %v415 = vpop.permute.xlu0 %414
        %418 = vset.pattern.permute.xlu0 0
        %419 = vperm.xlu0 %418, %v381
        %v420 = vpop.permute.xlu0 %419
        %v430 = vunpack.c.l.b16 %v362
        %v431 = vunpack.c.l.b16 %v363
        %v432 = vunpack.c.l.b16 %v364
        %v433 = vunpack.c.l.b16 %v365
        %v434 = vunpack.c.l.b16 %v366
        %v435 = vunpack.c.l.b16 %v367
        %v436 = vunpack.c.l.b16 %v368
        %v437 = vunpack.c.l.b16 %v369
        %v438 = vpack.c.b16 %v431, %v430
        %v439 = vpack.c.b16 %v433, %v432
        %v440 = vpack.c.b16 %v435, %v434
        %v441 = vpack.c.b16 %v437, %v436
        %v446 = vunpack.c.l.b16 %v370
        %v447 = vunpack.c.h.b16 %v370
        %v448 = vunpack.c.l.b16 %v371
        %v449 = vunpack.c.h.b16 %v371
        %v450 = vunpack.c.l.b16 %v372
        %v451 = vunpack.c.h.b16 %v372
        %v452 = vunpack.c.l.b16 %v373
        %v453 = vunpack.c.h.b16 %v373
        %v454 = vpack.c.b16 %v450, %v446
        %v455 = vpack.c.b16 %v451, %v447
        %v456 = vpack.c.b16 %v452, %v448
        %v457 = vpack.c.b16 %v453, %v449
        %vm462 = vcmask 130048
        %v464 = vsel %vm462, %v438, 0
        %v467 = vsel %vm462, %v439, 0
        %v470 = vsel %vm462, %v440, 0
        %v473 = vsel %vm462, %v441, 0
        %475 = vmatprep.subr.bf16.mxu0 %v455
        %476 = vmatpush1.bf16.msra.mxu0 %v454
        %477 = vmatprep.subr.bf16.mxu0 0
        %478 = vmatpush1.bf16.msra.mxu0 0
        %479 = vmatprep.subr.bf16.mxu0 0
        %480 = vmatpush1.bf16.msra.mxu0 0
        %481 = vmatprep.subr.bf16.mxu0 0
        %482 = vmatpush1.bf16.msra.mxu0 0
        %483 = vmatprep.subr.bf16.mxu0 0
        %484 = vmatpush1.bf16.msra.mxu0 0
        %485 = vmatprep.subr.bf16.mxu0 0
        %486 = vmatpush1.bf16.msra.mxu0 0
        %487 = vmatprep.subr.bf16.mxu0 0
        %488 = vmatpush1.bf16.msra.mxu0 0
        %489 = vmatprep.subr.bf16.mxu0 0
        %490 = vmatpush1.bf16.msra.mxu0 0
        %491 = vmatprep.subr.bf16.mxu0 0
        %492 = vmatpush1.bf16.msra.mxu0 0
        %493 = vmatprep.subr.bf16.mxu0 0
        %494 = vmatpush1.bf16.msra.mxu0 0
        %495 = vmatprep.subr.bf16.mxu0 0
        %496 = vmatpush1.bf16.msra.mxu0 0
        %497 = vmatprep.subr.bf16.mxu0 0
        %498 = vmatpush1.bf16.msra.mxu0 0
        %499 = vmatprep.subr.bf16.mxu0 0
        %500 = vmatpush1.bf16.msra.mxu0 0
        %501 = vmatprep.subr.bf16.mxu0 0
        %502 = vmatpush1.bf16.msra.mxu0 0
        %503 = vmatprep.subr.bf16.mxu0 0
        %504 = vmatpush1.bf16.msra.mxu0 0
        %505 = vmatprep.subr.bf16.mxu0 0
        %506 = vmatpush1.bf16.msra.mxu0 0
        %507 = vmatprep.mubr.bf16.mxu0 0
        %508 = vmatmul.mubr.bf16.gmra.mrb[0].mxu0 %v464
        %v509 = vpop.f32.mrb[0].mxu0
        %v510 = vadd.f32 %v385, %v509
        %v511 = vpop.f32.mrb[0].mxu0
        %v512 = vadd.f32 %v385, %v511
        %v513 = vpop.f32.mrb[0].mxu0
        %v514 = vadd.f32 %v390, %v513
        %v515 = vpop.f32.mrb[0].mxu0
        %v516 = vadd.f32 %v390, %v515
        %517 = vmatprep.mubr.bf16.mxu0 0
        %518 = vmatmul.mubr.bf16.gmra.mrb[0].mxu0 %v467
        %v519 = vpop.f32.mrb[0].mxu0
        %v520 = vadd.f32 %v395, %v519
        %v521 = vpop.f32.mrb[0].mxu0
        %v522 = vadd.f32 %v395, %v521
        %v523 = vpop.f32.mrb[0].mxu0
        %v524 = vadd.f32 %v400, %v523
        %v525 = vpop.f32.mrb[0].mxu0
        %v526 = vadd.f32 %v400, %v525
        %527 = vmatprep.mubr.bf16.mxu0 0
        %528 = vmatmul.mubr.bf16.gmra.mrb[0].mxu0 %v470
        %v529 = vpop.f32.mrb[0].mxu0
        %v530 = vadd.f32 %v405, %v529
        %v531 = vpop.f32.mrb[0].mxu0
        %v532 = vadd.f32 %v405, %v531
        %v533 = vpop.f32.mrb[0].mxu0
        %v534 = vadd.f32 %v410, %v533
        %v535 = vpop.f32.mrb[0].mxu0
        %v536 = vadd.f32 %v410, %v535
        %537 = vmatprep.mubr.bf16.mxu0 0
        %538 = vmatmul.mubr.bf16.gmra.mrb[0].mxu0 %v473
        %v539 = vpop.f32.mrb[0].mxu0
        %v540 = vadd.f32 %v415, %v539
        %v541 = vpop.f32.mrb[0].mxu0
        %v542 = vadd.f32 %v415, %v541
        %v543 = vpop.f32.mrb[0].mxu0
        %v544 = vadd.f32 %v420, %v543
        %v545 = vpop.f32.mrb[0].mxu0
        %v546 = vadd.f32 %v420, %v545
        %547 = vdwg.mxu0
        %548 = vmatprep.subr.bf16.mxu0 %v457
        %549 = vmatpush1.bf16.msra.mxu0 %v456
        %550 = vmatprep.subr.bf16.mxu0 0
        %551 = vmatpush1.bf16.msra.mxu0 0
        %552 = vmatprep.subr.bf16.mxu0 0
        %553 = vmatpush1.bf16.msra.mxu0 0
        %554 = vmatprep.subr.bf16.mxu0 0
        %555 = vmatpush1.bf16.msra.mxu0 0
        %556 = vmatprep.subr.bf16.mxu0 0
        %557 = vmatpush1.bf16.msra.mxu0 0
        %558 = vmatprep.subr.bf16.mxu0 0
        %559 = vmatpush1.bf16.msra.mxu0 0
        %560 = vmatprep.subr.bf16.mxu0 0
        %561 = vmatpush1.bf16.msra.mxu0 0
        %562 = vmatprep.subr.bf16.mxu0 0
        %563 = vmatpush1.bf16.msra.mxu0 0
        %564 = vmatprep.subr.bf16.mxu0 0
        %565 = vmatpush1.bf16.msra.mxu0 0
        %566 = vmatprep.subr.bf16.mxu0 0
        %567 = vmatpush1.bf16.msra.mxu0 0
        %568 = vmatprep.subr.bf16.mxu0 0
        %569 = vmatpush1.bf16.msra.mxu0 0
        %570 = vmatprep.subr.bf16.mxu0 0
        %571 = vmatpush1.bf16.msra.mxu0 0
        %572 = vmatprep.subr.bf16.mxu0 0
        %573 = vmatpush1.bf16.msra.mxu0 0
        %574 = vmatprep.subr.bf16.mxu0 0
        %575 = vmatpush1.bf16.msra.mxu0 0
        %576 = vmatprep.subr.bf16.mxu0 0
        %577 = vmatpush1.bf16.msra.mxu0 0
        %578 = vmatprep.subr.bf16.mxu0 0
        %579 = vmatpush1.bf16.msra.mxu0 0
        %580 = vmatprep.mubr.bf16.mxu0 0
        %581 = vmatmul.mubr.bf16.gmra.mrb[0].mxu0 %v464
        %v582 = vpop.f32.mrb[0].mxu0
        %v583 = vadd.f32 %v385, %v582
        %v584 = vpop.f32.mrb[0].mxu0
        %v585 = vadd.f32 %v385, %v584
        %v586 = vpop.f32.mrb[0].mxu0
        %v587 = vadd.f32 %v390, %v586
        %v588 = vpop.f32.mrb[0].mxu0
        %v589 = vadd.f32 %v390, %v588
        %590 = vmatprep.mubr.bf16.mxu0 0
        %591 = vmatmul.mubr.bf16.gmra.mrb[0].mxu0 %v467
        %v592 = vpop.f32.mrb[0].mxu0
        %v593 = vadd.f32 %v395, %v592
        %v594 = vpop.f32.mrb[0].mxu0
        %v595 = vadd.f32 %v395, %v594
        %v596 = vpop.f32.mrb[0].mxu0
        %v597 = vadd.f32 %v400, %v596
        %v598 = vpop.f32.mrb[0].mxu0
        %v599 = vadd.f32 %v400, %v598
        %600 = vmatprep.mubr.bf16.mxu0 0
        %601 = vmatmul.mubr.bf16.gmra.mrb[0].mxu0 %v470
        %v602 = vpop.f32.mrb[0].mxu0
        %v603 = vadd.f32 %v405, %v602
        %v604 = vpop.f32.mrb[0].mxu0
        %v605 = vadd.f32 %v405, %v604
        %v606 = vpop.f32.mrb[0].mxu0
        %v607 = vadd.f32 %v410, %v606
        %v608 = vpop.f32.mrb[0].mxu0
        %v609 = vadd.f32 %v410, %v608
        %610 = vmatprep.mubr.bf16.mxu0 0
        %611 = vmatmul.mubr.bf16.gmra.mrb[0].mxu0 %v473
        %v612 = vpop.f32.mrb[0].mxu0
        %v613 = vadd.f32 %v415, %v612
        %v614 = vpop.f32.mrb[0].mxu0
        %v615 = vadd.f32 %v415, %v614
        %v616 = vpop.f32.mrb[0].mxu0
        %v617 = vadd.f32 %v420, %v616
        %v618 = vpop.f32.mrb[0].mxu0
        %v619 = vadd.f32 %v420, %v618
        %620 = vdwg.mxu0
        %v621 = vmax.f32 %v510, 0.0
        %v622 = vmax.f32 %v512, 0.0
        %v623 = vmax.f32 %v583, 0.0
        %v624 = vmax.f32 %v585, 0.0
        %v625 = vmax.f32 %v514, 0.0
        %v626 = vmax.f32 %v516, 0.0
        %v627 = vmax.f32 %v587, 0.0
        %v628 = vmax.f32 %v589, 0.0
        %v629 = vmax.f32 %v520, 0.0
        %v630 = vmax.f32 %v522, 0.0
        %v631 = vmax.f32 %v593, 0.0
        %v632 = vmax.f32 %v595, 0.0
        %v633 = vmax.f32 %v524, 0.0
        %v634 = vmax.f32 %v526, 0.0
        %v635 = vmax.f32 %v597, 0.0
        %v636 = vmax.f32 %v599, 0.0
        %v637 = vmax.f32 %v530, 0.0
        %v638 = vmax.f32 %v532, 0.0
        %v639 = vmax.f32 %v603, 0.0
        %v640 = vmax.f32 %v605, 0.0
        %v641 = vmax.f32 %v534, 0.0
        %v642 = vmax.f32 %v536, 0.0
        %v643 = vmax.f32 %v607, 0.0
        %v644 = vmax.f32 %v609, 0.0
        %v645 = vmax.f32 %v540, 0.0
        %v646 = vmax.f32 %v542, 0.0
        %v647 = vmax.f32 %v613, 0.0
        %v648 = vmax.f32 %v615, 0.0
        %v649 = vmax.f32 %v544, 0.0
        %v650 = vmax.f32 %v546, 0.0
        %v651 = vmax.f32 %v617, 0.0
        %v652 = vmax.f32 %v619, 0.0
        %v653 = vld [vmem:[%s3] sm:$0xf]
        %v654 = vld [vmem:[%s3 + $0x4] sm:$0xf]
        %v655 = vld [vmem:[%s3 + $0x8] sm:$0xf]
        %v656 = vld [vmem:[%s3 + $0xc] sm:$0xf]
        %v657 = vld [vmem:[%s3 + $0x10] sm:$0xf]
        %v658 = vld [vmem:[%s3 + $0x14] sm:$0xf]
        %v659 = vld [vmem:[%s3 + $0x18] sm:$0xf]
        %v660 = vld [vmem:[%s3 + $0x1c] sm:$0xf]
        %v661 = vld [vmem:[%s3 + $0x20] sm:$0xf]
        %v662 = vld [vmem:[%s3 + $0x24] sm:$0xf]
        %v663 = vld [vmem:[%s3 + $0x28] sm:$0xf]
        %v664 = vld [vmem:[%s3 + $0x2c] sm:$0xf]
        %v665 = vld [vmem:[%s3 + $0x30] sm:$0xf]
        %v666 = vld [vmem:[%s3 + $0x34] sm:$0xf]
        %v667 = vld [vmem:[%s3 + $0x38] sm:$0xf]
        %v668 = vld [vmem:[%s3 + $0x3c] sm:$0xf]
        %v669 = vld [vmem:[%s3 + $0x40] sm:$0xf]
        %v670 = vld [vmem:[%s3 + $0x44] sm:$0xf]
        %v671 = vld [vmem:[%s3 + $0x48] sm:$0xf]
        %v672 = vld [vmem:[%s3 + $0x4c] sm:$0xf]
        %v673 = vld [vmem:[%s3 + $0x50] sm:$0xf]
        %v674 = vld [vmem:[%s3 + $0x54] sm:$0xf]
        %v675 = vld [vmem:[%s3 + $0x58] sm:$0xf]
        %v676 = vld [vmem:[%s3 + $0x5c] sm:$0xf]
        %v677 = vld [vmem:[%s3 + $0x60] sm:$0xf]
        %v678 = vld [vmem:[%s3 + $0x64] sm:$0xf]
        %v679 = vld [vmem:[%s3 + $0x68] sm:$0xf]
        %v680 = vld [vmem:[%s3 + $0x6c] sm:$0xf]
        %v681 = vld [vmem:[%s3 + $0x70] sm:$0xf]
        %v682 = vld [vmem:[%s3 + $0x74] sm:$0xf]
        %v683 = vld [vmem:[%s3 + $0x78] sm:$0xf]
        %v684 = vld [vmem:[%s3 + $0x7c] sm:$0xf]
        %v685 = vpack.c.bf16 %v625, %v621
        %v686 = vpack.c.bf16 %v626, %v622
        %v687 = vpack.c.bf16 %v627, %v623
        %v688 = vpack.c.bf16 %v628, %v624
        %v689 = vpack.c.bf16 %v633, %v629
        %v690 = vpack.c.bf16 %v634, %v630
        %v691 = vpack.c.bf16 %v635, %v631
        %v692 = vpack.c.bf16 %v636, %v632
        %v693 = vpack.c.bf16 %v641, %v637
        %v694 = vpack.c.bf16 %v642, %v638
        %v695 = vpack.c.bf16 %v643, %v639
        %v696 = vpack.c.bf16 %v644, %v640
        %v697 = vpack.c.bf16 %v649, %v645
        %v698 = vpack.c.bf16 %v650, %v646
        %v699 = vpack.c.bf16 %v651, %v647
        %v700 = vpack.c.bf16 %v652, %v648
        %v701 = vld [vmem:[%s4] sm:$0xff]
        %v702 = vld [vmem:[%s4 + $0x8] sm:$0xff]
        %v703 = vld [vmem:[%s4 + $0x10] sm:$0xff]
        %v704 = vld [vmem:[%s4 + $0x18] sm:$0xff]
        %v705 = vld [vmem:[%s4 + $0x20] sm:$0xff]
        %v706 = vld [vmem:[%s4 + $0x28] sm:$0xff]
        %v707 = vld [vmem:[%s4 + $0x30] sm:$0xff]
        %v708 = vld [vmem:[%s4 + $0x38] sm:$0xff]
        %v709 = vld [vmem:[%s4 + $0x40] sm:$0xff]
        %v710 = vld [vmem:[%s4 + $0x48] sm:$0xff]
        %v711 = vld [vmem:[%s4 + $0x50] sm:$0xff]
        %v712 = vld [vmem:[%s4 + $0x58] sm:$0xff]
        %v713 = vld [vmem:[%s4 + $0x60] sm:$0xff]
        %v714 = vld [vmem:[%s4 + $0x68] sm:$0xff]
        %v715 = vld [vmem:[%s4 + $0x70] sm:$0xff]
        %v716 = vld [vmem:[%s4 + $0x78] sm:$0xff]
        %v717 = vld [vmem:[%s4 + $0x80] sm:$0xff]
        %v718 = vld [vmem:[%s4 + $0x88] sm:$0xff]
        %v719 = vld [vmem:[%s4 + $0x90] sm:$0xff]
        %v720 = vld [vmem:[%s4 + $0x98] sm:$0xff]
        %v721 = vld [vmem:[%s4 + $0xa0] sm:$0xff]
        %v722 = vld [vmem:[%s4 + $0xa8] sm:$0xff]
        %v723 = vld [vmem:[%s4 + $0xb0] sm:$0xff]
        %v724 = vld [vmem:[%s4 + $0xb8] sm:$0xff]
        %v725 = vld [vmem:[%s4 + $0xc0] sm:$0xff]
        %v726 = vld [vmem:[%s4 + $0xc8] sm:$0xff]
        %v727 = vld [vmem:[%s4 + $0xd0] sm:$0xff]
        %v728 = vld [vmem:[%s4 + $0xd8] sm:$0xff]
        %v729 = vld [vmem:[%s4 + $0xe0] sm:$0xff]
        %v730 = vld [vmem:[%s4 + $0xe8] sm:$0xff]
        %v731 = vld [vmem:[%s4 + $0xf0] sm:$0xff]
        %v732 = vld [vmem:[%s4 + $0xf8] sm:$0xff]
        %734 = vset.pattern.permute.xlu0 0
        %735 = vperm.xlu0 %734, %v701
        %v736 = vpop.permute.xlu0 %735
        %739 = vset.pattern.permute.xlu0 0
        %740 = vperm.xlu0 %739, %v702
        %v741 = vpop.permute.xlu0 %740
        %744 = vset.pattern.permute.xlu0 0
        %745 = vperm.xlu0 %744, %v703
        %v746 = vpop.permute.xlu0 %745
        %749 = vset.pattern.permute.xlu0 0
        %750 = vperm.xlu0 %749, %v704
        %v751 = vpop.permute.xlu0 %750
        %754 = vset.pattern.permute.xlu0 0
        %755 = vperm.xlu0 %754, %v705
        %v756 = vpop.permute.xlu0 %755
        %759 = vset.pattern.permute.xlu0 0
        %760 = vperm.xlu0 %759, %v706
        %v761 = vpop.permute.xlu0 %760
        %764 = vset.pattern.permute.xlu0 0
        %765 = vperm.xlu0 %764, %v707
        %v766 = vpop.permute.xlu0 %765
        %769 = vset.pattern.permute.xlu0 0
        %770 = vperm.xlu0 %769, %v708
        %v771 = vpop.permute.xlu0 %770
        %774 = vset.pattern.permute.xlu0 0
        %775 = vperm.xlu0 %774, %v709
        %v776 = vpop.permute.xlu0 %775
        %779 = vset.pattern.permute.xlu0 0
        %780 = vperm.xlu0 %779, %v710
        %v781 = vpop.permute.xlu0 %780
        %784 = vset.pattern.permute.xlu0 0
        %785 = vperm.xlu0 %784, %v711
        %v786 = vpop.permute.xlu0 %785
        %789 = vset.pattern.permute.xlu0 0
        %790 = vperm.xlu0 %789, %v712
        %v791 = vpop.permute.xlu0 %790
        %794 = vset.pattern.permute.xlu0 0
        %795 = vperm.xlu0 %794, %v713
        %v796 = vpop.permute.xlu0 %795
        %799 = vset.pattern.permute.xlu0 0
        %800 = vperm.xlu0 %799, %v714
        %v801 = vpop.permute.xlu0 %800
        %804 = vset.pattern.permute.xlu0 0
        %805 = vperm.xlu0 %804, %v715
        %v806 = vpop.permute.xlu0 %805
        %809 = vset.pattern.permute.xlu0 0
        %810 = vperm.xlu0 %809, %v716
        %v811 = vpop.permute.xlu0 %810
        %814 = vset.pattern.permute.xlu0 0
        %815 = vperm.xlu0 %814, %v717
        %v816 = vpop.permute.xlu0 %815
        %819 = vset.pattern.permute.xlu0 0
        %820 = vperm.xlu0 %819, %v718
        %v821 = vpop.permute.xlu0 %820
        %824 = vset.pattern.permute.xlu0 0
        %825 = vperm.xlu0 %824, %v719
        %v826 = vpop.permute.xlu0 %825
        %829 = vset.pattern.permute.xlu0 0
        %830 = vperm.xlu0 %829, %v720
        %v831 = vpop.permute.xlu0 %830
        %834 = vset.pattern.permute.xlu0 0
        %835 = vperm.xlu0 %834, %v721
        %v836 = vpop.permute.xlu0 %835
        %839 = vset.pattern.permute.xlu0 0
        %840 = vperm.xlu0 %839, %v722
        %v841 = vpop.permute.xlu0 %840
        %844 = vset.pattern.permute.xlu0 0
        %845 = vperm.xlu0 %844, %v723
        %v846 = vpop.permute.xlu0 %845
        %849 = vset.pattern.permute.xlu0 0
        %850 = vperm.xlu0 %849, %v724
        %v851 = vpop.permute.xlu0 %850
        %854 = vset.pattern.permute.xlu0 0
        %855 = vperm.xlu0 %854, %v725
        %v856 = vpop.permute.xlu0 %855
        %859 = vset.pattern.permute.xlu0 0
        %860 = vperm.xlu0 %859, %v726
        %v861 = vpop.permute.xlu0 %860
        %864 = vset.pattern.permute.xlu0 0
        %865 = vperm.xlu0 %864, %v727
        %v866 = vpop.permute.xlu0 %865
        %869 = vset.pattern.permute.xlu0 0
        %870 = vperm.xlu0 %869, %v728
        %v871 = vpop.permute.xlu0 %870
        %874 = vset.pattern.permute.xlu0 0
        %875 = vperm.xlu0 %874, %v729
        %v876 = vpop.permute.xlu0 %875
        %879 = vset.pattern.permute.xlu0 0
        %880 = vperm.xlu0 %879, %v730
        %v881 = vpop.permute.xlu0 %880
        %884 = vset.pattern.permute.xlu0 0
        %885 = vperm.xlu0 %884, %v731
        %v886 = vpop.permute.xlu0 %885
        %889 = vset.pattern.permute.xlu0 0
        %890 = vperm.xlu0 %889, %v732
        %v891 = vpop.permute.xlu0 %890
        %v925 = vunpack.c.l.b16 %v653
        %v926 = vunpack.c.l.b16 %v654
        %v927 = vunpack.c.l.b16 %v655
        %v928 = vunpack.c.l.b16 %v656
        %v929 = vunpack.c.l.b16 %v657
        %v930 = vunpack.c.l.b16 %v658
        %v931 = vunpack.c.l.b16 %v659
        %v932 = vunpack.c.l.b16 %v660
        %v933 = vunpack.c.l.b16 %v661
        %v934 = vunpack.c.l.b16 %v662
        %v935 = vunpack.c.l.b16 %v663
        %v936 = vunpack.c.l.b16 %v664
        %v937 = vunpack.c.l.b16 %v665
        %v938 = vunpack.c.l.b16 %v666
        %v939 = vunpack.c.l.b16 %v667
        %v940 = vunpack.c.l.b16 %v668
        %v941 = vunpack.c.l.b16 %v669
        %v942 = vunpack.c.l.b16 %v670
        %v943 = vunpack.c.l.b16 %v671
        %v944 = vunpack.c.l.b16 %v672
        %v945 = vunpack.c.l.b16 %v673
        %v946 = vunpack.c.l.b16 %v674
        %v947 = vunpack.c.l.b16 %v675
        %v948 = vunpack.c.l.b16 %v676
        %v949 = vunpack.c.l.b16 %v677
        %v950 = vunpack.c.l.b16 %v678
        %v951 = vunpack.c.l.b16 %v679
        %v952 = vunpack.c.l.b16 %v680
        %v953 = vunpack.c.l.b16 %v681
        %v954 = vunpack.c.l.b16 %v682
        %v955 = vunpack.c.l.b16 %v683
        %v956 = vunpack.c.l.b16 %v684
        %v957 = vpack.c.b16 %v926, %v925
        %v958 = vpack.c.b16 %v928, %v927
        %v959 = vpack.c.b16 %v930, %v929
        %v960 = vpack.c.b16 %v932, %v931
        %v961 = vpack.c.b16 %v934, %v933
        %v962 = vpack.c.b16 %v936, %v935
        %v963 = vpack.c.b16 %v938, %v937
        %v964 = vpack.c.b16 %v940, %v939
        %v965 = vpack.c.b16 %v942, %v941
        %v966 = vpack.c.b16 %v944, %v943
        %v967 = vpack.c.b16 %v946, %v945
        %v968 = vpack.c.b16 %v948, %v947
        %v969 = vpack.c.b16 %v950, %v949
        %v970 = vpack.c.b16 %v952, %v951
        %v971 = vpack.c.b16 %v954, %v953
        %v972 = vpack.c.b16 %v956, %v955
        %vm973 = vcmask 523264
        %v975 = vsel %vm973, %v957, 0
        %v978 = vsel %vm973, %v958, 0
        %v981 = vsel %vm973, %v959, 0
        %v984 = vsel %vm973, %v960, 0
        %v987 = vsel %vm973, %v961, 0
        %v990 = vsel %vm973, %v962, 0
        %v993 = vsel %vm973, %v963, 0
        %v996 = vsel %vm973, %v964, 0
        %v999 = vsel %vm973, %v965, 0
        %v1002 = vsel %vm973, %v966, 0
        %v1005 = vsel %vm973, %v967, 0
        %v1008 = vsel %vm973, %v968, 0
        %v1011 = vsel %vm973, %v969, 0
        %v1014 = vsel %vm973, %v970, 0
        %v1017 = vsel %vm973, %v971, 0
        %v1020 = vsel %vm973, %v972, 0
        %1022 = vmatprep.subr.bf16.mxu0 %v686
        %1023 = vmatpush1.bf16.msra.mxu0 %v685
        %1024 = vmatprep.subr.bf16.mxu0 %v690
        %1025 = vmatpush1.bf16.msra.mxu0 %v689
        %1026 = vmatprep.subr.bf16.mxu0 %v694
        %1027 = vmatpush1.bf16.msra.mxu0 %v693
        %1028 = vmatprep.subr.bf16.mxu0 %v698
        %1029 = vmatpush1.bf16.msra.mxu0 %v697
        %1030 = vmatprep.subr.bf16.mxu0 0
        %1031 = vmatpush1.bf16.msra.mxu0 0
        %1032 = vmatprep.subr.bf16.mxu0 0
        %1033 = vmatpush1.bf16.msra.mxu0 0
        %1034 = vmatprep.subr.bf16.mxu0 0
        %1035 = vmatpush1.bf16.msra.mxu0 0
        %1036 = vmatprep.subr.bf16.mxu0 0
        %1037 = vmatpush1.bf16.msra.mxu0 0
        %1038 = vmatprep.subr.bf16.mxu0 0
        %1039 = vmatpush1.bf16.msra.mxu0 0
        %1040 = vmatprep.subr.bf16.mxu0 0
        %1041 = vmatpush1.bf16.msra.mxu0 0
        %1042 = vmatprep.subr.bf16.mxu0 0
        %1043 = vmatpush1.bf16.msra.mxu0 0
        %1044 = vmatprep.subr.bf16.mxu0 0
        %1045 = vmatpush1.bf16.msra.mxu0 0
        %1046 = vmatprep.subr.bf16.mxu0 0
        %1047 = vmatpush1.bf16.msra.mxu0 0
        %1048 = vmatprep.subr.bf16.mxu0 0
        %1049 = vmatpush1.bf16.msra.mxu0 0
        %1050 = vmatprep.subr.bf16.mxu0 0
        %1051 = vmatpush1.bf16.msra.mxu0 0
        %1052 = vmatprep.subr.bf16.mxu0 0
        %1053 = vmatpush1.bf16.msra.mxu0 0
        %1054 = vmatprep.mubr.bf16.mxu0 0
        %1055 = vmatmul.mubr.bf16.gmra.mrb[0].mxu0 %v975
        %v1056 = vpop.f32.mrb[0].mxu0
        %v1057 = vadd.f32 %v736, %v1056
        %v1058 = vpop.f32.mrb[0].mxu0
        %v1059 = vadd.f32 %v736, %v1058
        %v1060 = vpop.f32.mrb[0].mxu0
        %v1061 = vadd.f32 %v741, %v1060
        %v1062 = vpop.f32.mrb[0].mxu0
        %v1063 = vadd.f32 %v741, %v1062
        %1064 = vmatprep.mubr.bf16.mxu0 0
        %1065 = vmatmul.mubr.bf16.gmra.mrb[0].mxu0 %v978
        %v1066 = vpop.f32.mrb[0].mxu0
        %v1067 = vadd.f32 %v746, %v1066
        %v1068 = vpop.f32.mrb[0].mxu0
        %v1069 = vadd.f32 %v746, %v1068
        %v1070 = vpop.f32.mrb[0].mxu0
        %v1071 = vadd.f32 %v751, %v1070
        %v1072 = vpop.f32.mrb[0].mxu0
        %v1073 = vadd.f32 %v751, %v1072
        %1074 = vmatprep.mubr.bf16.mxu0 0
        %1075 = vmatmul.mubr.bf16.gmra.mrb[0].mxu0 %v981
        %v1076 = vpop.f32.mrb[0].mxu0
        %v1077 = vadd.f32 %v756, %v1076
        %v1078 = vpop.f32.mrb[0].mxu0
        %v1079 = vadd.f32 %v756, %v1078
        %v1080 = vpop.f32.mrb[0].mxu0
        %v1081 = vadd.f32 %v761, %v1080
        %v1082 = vpop.f32.mrb[0].mxu0
        %v1083 = vadd.f32 %v761, %v1082
        %1084 = vmatprep.mubr.bf16.mxu0 0
        %1085 = vmatmul.mubr.bf16.gmra.mrb[0].mxu0 %v984
        %v1086 = vpop.f32.mrb[0].mxu0
        %v1087 = vadd.f32 %v766, %v1086
        %v1088 = vpop.f32.mrb[0].mxu0
        %v1089 = vadd.f32 %v766, %v1088
        %v1090 = vpop.f32.mrb[0].mxu0
        %v1091 = vadd.f32 %v771, %v1090
        %v1092 = vpop.f32.mrb[0].mxu0
        %v1093 = vadd.f32 %v771, %v1092
        %1094 = vmatprep.mubr.bf16.mxu0 0
        %1095 = vmatmul.mubr.bf16.gmra.mrb[0].mxu0 %v987
        %v1096 = vpop.f32.mrb[0].mxu0
        %v1097 = vadd.f32 %v776, %v1096
        %v1098 = vpop.f32.mrb[0].mxu0
        %v1099 = vadd.f32 %v776, %v1098
        %v1100 = vpop.f32.mrb[0].mxu0
        %v1101 = vadd.f32 %v781, %v1100
        %v1102 = vpop.f32.mrb[0].mxu0
        %v1103 = vadd.f32 %v781, %v1102
        %1104 = vmatprep.mubr.bf16.mxu0 0
        %1105 = vmatmul.mubr.bf16.gmra.mrb[0].mxu0 %v990
        %v1106 = vpop.f32.mrb[0].mxu0
        %v1107 = vadd.f32 %v786, %v1106
        %v1108 = vpop.f32.mrb[0].mxu0
        %v1109 = vadd.f32 %v786, %v1108
        %v1110 = vpop.f32.mrb[0].mxu0
        %v1111 = vadd.f32 %v791, %v1110
        %v1112 = vpop.f32.mrb[0].mxu0
        %v1113 = vadd.f32 %v791, %v1112
        %1114 = vmatprep.mubr.bf16.mxu0 0
        %1115 = vmatmul.mubr.bf16.gmra.mrb[0].mxu0 %v993
        %v1116 = vpop.f32.mrb[0].mxu0
        %v1117 = vadd.f32 %v796, %v1116
        %v1118 = vpop.f32.mrb[0].mxu0
        %v1119 = vadd.f32 %v796, %v1118
        %v1120 = vpop.f32.mrb[0].mxu0
        %v1121 = vadd.f32 %v801, %v1120
        %v1122 = vpop.f32.mrb[0].mxu0
        %v1123 = vadd.f32 %v801, %v1122
        %1124 = vmatprep.mubr.bf16.mxu0 0
        %1125 = vmatmul.mubr.bf16.gmra.mrb[0].mxu0 %v996
        %v1126 = vpop.f32.mrb[0].mxu0
        %v1127 = vadd.f32 %v806, %v1126
        %v1128 = vpop.f32.mrb[0].mxu0
        %v1129 = vadd.f32 %v806, %v1128
        %v1130 = vpop.f32.mrb[0].mxu0
        %v1131 = vadd.f32 %v811, %v1130
        %v1132 = vpop.f32.mrb[0].mxu0
        %v1133 = vadd.f32 %v811, %v1132
        %1134 = vmatprep.mubr.bf16.mxu0 0
        %1135 = vmatmul.mubr.bf16.gmra.mrb[0].mxu0 %v999
        %v1136 = vpop.f32.mrb[0].mxu0
        %v1137 = vadd.f32 %v816, %v1136
        %v1138 = vpop.f32.mrb[0].mxu0
        %v1139 = vadd.f32 %v816, %v1138
        %v1140 = vpop.f32.mrb[0].mxu0
        %v1141 = vadd.f32 %v821, %v1140
        %v1142 = vpop.f32.mrb[0].mxu0
        %v1143 = vadd.f32 %v821, %v1142
        %1144 = vmatprep.mubr.bf16.mxu0 0
        %1145 = vmatmul.mubr.bf16.gmra.mrb[0].mxu0 %v1002
        %v1146 = vpop.f32.mrb[0].mxu0
        %v1147 = vadd.f32 %v826, %v1146
        %v1148 = vpop.f32.mrb[0].mxu0
        %v1149 = vadd.f32 %v826, %v1148
        %v1150 = vpop.f32.mrb[0].mxu0
        %v1151 = vadd.f32 %v831, %v1150
        %v1152 = vpop.f32.mrb[0].mxu0
        %v1153 = vadd.f32 %v831, %v1152
        %1154 = vmatprep.mubr.bf16.mxu0 0
        %1155 = vmatmul.mubr.bf16.gmra.mrb[0].mxu0 %v1005
        %v1156 = vpop.f32.mrb[0].mxu0
        %v1157 = vadd.f32 %v836, %v1156
        %v1158 = vpop.f32.mrb[0].mxu0
        %v1159 = vadd.f32 %v836, %v1158
        %v1160 = vpop.f32.mrb[0].mxu0
        %v1161 = vadd.f32 %v841, %v1160
        %v1162 = vpop.f32.mrb[0].mxu0
        %v1163 = vadd.f32 %v841, %v1162
        %1164 = vmatprep.mubr.bf16.mxu0 0
        %1165 = vmatmul.mubr.bf16.gmra.mrb[0].mxu0 %v1008
        %v1166 = vpop.f32.mrb[0].mxu0
        %v1167 = vadd.f32 %v846, %v1166
        %v1168 = vpop.f32.mrb[0].mxu0
        %v1169 = vadd.f32 %v846, %v1168
        %v1170 = vpop.f32.mrb[0].mxu0
        %v1171 = vadd.f32 %v851, %v1170
        %v1172 = vpop.f32.mrb[0].mxu0
        %v1173 = vadd.f32 %v851, %v1172
        %1174 = vmatprep.mubr.bf16.mxu0 0
        %1175 = vmatmul.mubr.bf16.gmra.mrb[0].mxu0 %v1011
        %v1176 = vpop.f32.mrb[0].mxu0
        %v1177 = vadd.f32 %v856, %v1176
        %v1178 = vpop.f32.mrb[0].mxu0
        %v1179 = vadd.f32 %v856, %v1178
        %v1180 = vpop.f32.mrb[0].mxu0
        %v1181 = vadd.f32 %v861, %v1180
        %v1182 = vpop.f32.mrb[0].mxu0
        %v1183 = vadd.f32 %v861, %v1182
        %1184 = vmatprep.mubr.bf16.mxu0 0
        %1185 = vmatmul.mubr.bf16.gmra.mrb[0].mxu0 %v1014
        %v1186 = vpop.f32.mrb[0].mxu0
        %v1187 = vadd.f32 %v866, %v1186
        %v1188 = vpop.f32.mrb[0].mxu0
        %v1189 = vadd.f32 %v866, %v1188
        %v1190 = vpop.f32.mrb[0].mxu0
        %v1191 = vadd.f32 %v871, %v1190
        %v1192 = vpop.f32.mrb[0].mxu0
        %v1193 = vadd.f32 %v871, %v1192
        %1194 = vmatprep.mubr.bf16.mxu0 0
        %1195 = vmatmul.mubr.bf16.gmra.mrb[0].mxu0 %v1017
        %v1196 = vpop.f32.mrb[0].mxu0
        %v1197 = vadd.f32 %v876, %v1196
        %v1198 = vpop.f32.mrb[0].mxu0
        %v1199 = vadd.f32 %v876, %v1198
        %v1200 = vpop.f32.mrb[0].mxu0
        %v1201 = vadd.f32 %v881, %v1200
        %v1202 = vpop.f32.mrb[0].mxu0
        %v1203 = vadd.f32 %v881, %v1202
        %1204 = vmatprep.mubr.bf16.mxu0 0
        %1205 = vmatmul.mubr.bf16.gmra.mrb[0].mxu0 %v1020
        %v1206 = vpop.f32.mrb[0].mxu0
        %v1207 = vadd.f32 %v886, %v1206
        %v1208 = vpop.f32.mrb[0].mxu0
        %v1209 = vadd.f32 %v886, %v1208
        %v1210 = vpop.f32.mrb[0].mxu0
        %v1211 = vadd.f32 %v891, %v1210
        %v1212 = vpop.f32.mrb[0].mxu0
        %v1213 = vadd.f32 %v891, %v1212
        %1214 = vdwg.mxu0
        %1215 = vmatprep.subr.bf16.mxu0 %v688
        %1216 = vmatpush1.bf16.msra.mxu0 %v687
        %1217 = vmatprep.subr.bf16.mxu0 %v692
        %1218 = vmatpush1.bf16.msra.mxu0 %v691
        %1219 = vmatprep.subr.bf16.mxu0 %v696
        %1220 = vmatpush1.bf16.msra.mxu0 %v695
        %1221 = vmatprep.subr.bf16.mxu0 %v700
        %1222 = vmatpush1.bf16.msra.mxu0 %v699
        %1223 = vmatprep.subr.bf16.mxu0 0
        %1224 = vmatpush1.bf16.msra.mxu0 0
        %1225 = vmatprep.subr.bf16.mxu0 0
        %1226 = vmatpush1.bf16.msra.mxu0 0
        %1227 = vmatprep.subr.bf16.mxu0 0
        %1228 = vmatpush1.bf16.msra.mxu0 0
        %1229 = vmatprep.subr.bf16.mxu0 0
        %1230 = vmatpush1.bf16.msra.mxu0 0
        %1231 = vmatprep.subr.bf16.mxu0 0
        %1232 = vmatpush1.bf16.msra.mxu0 0
        %1233 = vmatprep.subr.bf16.mxu0 0
        %1234 = vmatpush1.bf16.msra.mxu0 0
        %1235 = vmatprep.subr.bf16.mxu0 0
        %1236 = vmatpush1.bf16.msra.mxu0 0
        %1237 = vmatprep.subr.bf16.mxu0 0
        %1238 = vmatpush1.bf16.msra.mxu0 0
        %1239 = vmatprep.subr.bf16.mxu0 0
        %1240 = vmatpush1.bf16.msra.mxu0 0
        %1241 = vmatprep.subr.bf16.mxu0 0
        %1242 = vmatpush1.bf16.msra.mxu0 0
        %1243 = vmatprep.subr.bf16.mxu0 0
        %1244 = vmatpush1.bf16.msra.mxu0 0
        %1245 = vmatprep.subr.bf16.mxu0 0
        %1246 = vmatpush1.bf16.msra.mxu0 0
        %1247 = vmatprep.mubr.bf16.mxu0 0
        %1248 = vmatmul.mubr.bf16.gmra.mrb[0].mxu0 %v975
        %v1249 = vpop.f32.mrb[0].mxu0
        %v1250 = vadd.f32 %v736, %v1249
        %v1251 = vpop.f32.mrb[0].mxu0
        %v1252 = vadd.f32 %v736, %v1251
        %v1253 = vpop.f32.mrb[0].mxu0
        %v1254 = vadd.f32 %v741, %v1253
        %v1255 = vpop.f32.mrb[0].mxu0
        %v1256 = vadd.f32 %v741, %v1255
        %1257 = vmatprep.mubr.bf16.mxu0 0
        %1258 = vmatmul.mubr.bf16.gmra.mrb[0].mxu0 %v978
        %v1259 = vpop.f32.mrb[0].mxu0
        %v1260 = vadd.f32 %v746, %v1259
        %v1261 = vpop.f32.mrb[0].mxu0
        %v1262 = vadd.f32 %v746, %v1261
        %v1263 = vpop.f32.mrb[0].mxu0
        %v1264 = vadd.f32 %v751, %v1263
        %v1265 = vpop.f32.mrb[0].mxu0
        %v1266 = vadd.f32 %v751, %v1265
        %1267 = vmatprep.mubr.bf16.mxu0 0
        %1268 = vmatmul.mubr.bf16.gmra.mrb[0].mxu0 %v981
        %v1269 = vpop.f32.mrb[0].mxu0
        %v1270 = vadd.f32 %v756, %v1269
        %v1271 = vpop.f32.mrb[0].mxu0
        %v1272 = vadd.f32 %v756, %v1271
        %v1273 = vpop.f32.mrb[0].mxu0
        %v1274 = vadd.f32 %v761, %v1273
        %v1275 = vpop.f32.mrb[0].mxu0
        %v1276 = vadd.f32 %v761, %v1275
        %1277 = vmatprep.mubr.bf16.mxu0 0
        %1278 = vmatmul.mubr.bf16.gmra.mrb[0].mxu0 %v984
        %v1279 = vpop.f32.mrb[0].mxu0
        %v1280 = vadd.f32 %v766, %v1279
        %v1281 = vpop.f32.mrb[0].mxu0
        %v1282 = vadd.f32 %v766, %v1281
        %v1283 = vpop.f32.mrb[0].mxu0
        %v1284 = vadd.f32 %v771, %v1283
        %v1285 = vpop.f32.mrb[0].mxu0
        %v1286 = vadd.f32 %v771, %v1285
        %1287 = vmatprep.mubr.bf16.mxu0 0
        %1288 = vmatmul.mubr.bf16.gmra.mrb[0].mxu0 %v987
        %v1289 = vpop.f32.mrb[0].mxu0
        %v1290 = vadd.f32 %v776, %v1289
        %v1291 = vpop.f32.mrb[0].mxu0
        %v1292 = vadd.f32 %v776, %v1291
        %v1293 = vpop.f32.mrb[0].mxu0
        %v1294 = vadd.f32 %v781, %v1293
        %v1295 = vpop.f32.mrb[0].mxu0
        %v1296 = vadd.f32 %v781, %v1295
        %1297 = vmatprep.mubr.bf16.mxu0 0
        %1298 = vmatmul.mubr.bf16.gmra.mrb[0].mxu0 %v990
        %v1299 = vpop.f32.mrb[0].mxu0
        %v1300 = vadd.f32 %v786, %v1299
        %v1301 = vpop.f32.mrb[0].mxu0
        %v1302 = vadd.f32 %v786, %v1301
        %v1303 = vpop.f32.mrb[0].mxu0
        %v1304 = vadd.f32 %v791, %v1303
        %v1305 = vpop.f32.mrb[0].mxu0
        %v1306 = vadd.f32 %v791, %v1305
        %1307 = vmatprep.mubr.bf16.mxu0 0
        %1308 = vmatmul.mubr.bf16.gmra.mrb[0].mxu0 %v993
        %v1309 = vpop.f32.mrb[0].mxu0
        %v1310 = vadd.f32 %v796, %v1309
        %v1311 = vpop.f32.mrb[0].mxu0
        %v1312 = vadd.f32 %v796, %v1311
        %v1313 = vpop.f32.mrb[0].mxu0
        %v1314 = vadd.f32 %v801, %v1313
        %v1315 = vpop.f32.mrb[0].mxu0
        %v1316 = vadd.f32 %v801, %v1315
        %1317 = vmatprep.mubr.bf16.mxu0 0
        %1318 = vmatmul.mubr.bf16.gmra.mrb[0].mxu0 %v996
        %v1319 = vpop.f32.mrb[0].mxu0
        %v1320 = vadd.f32 %v806, %v1319
        %v1321 = vpop.f32.mrb[0].mxu0
        %v1322 = vadd.f32 %v806, %v1321
        %v1323 = vpop.f32.mrb[0].mxu0
        %v1324 = vadd.f32 %v811, %v1323
        %v1325 = vpop.f32.mrb[0].mxu0
        %v1326 = vadd.f32 %v811, %v1325
        %1327 = vmatprep.mubr.bf16.mxu0 0
        %1328 = vmatmul.mubr.bf16.gmra.mrb[0].mxu0 %v999
        %v1329 = vpop.f32.mrb[0].mxu0
        %v1330 = vadd.f32 %v816, %v1329
        %v1331 = vpop.f32.mrb[0].mxu0
        %v1332 = vadd.f32 %v816, %v1331
        %v1333 = vpop.f32.mrb[0].mxu0
        %v1334 = vadd.f32 %v821, %v1333
        %v1335 = vpop.f32.mrb[0].mxu0
        %v1336 = vadd.f32 %v821, %v1335
        %1337 = vmatprep.mubr.bf16.mxu0 0
        %1338 = vmatmul.mubr.bf16.gmra.mrb[0].mxu0 %v1002
        %v1339 = vpop.f32.mrb[0].mxu0
        %v1340 = vadd.f32 %v826, %v1339
        %v1341 = vpop.f32.mrb[0].mxu0
        %v1342 = vadd.f32 %v826, %v1341
        %v1343 = vpop.f32.mrb[0].mxu0
        %v1344 = vadd.f32 %v831, %v1343
        %v1345 = vpop.f32.mrb[0].mxu0
        %v1346 = vadd.f32 %v831, %v1345
        %1347 = vmatprep.mubr.bf16.mxu0 0
        %1348 = vmatmul.mubr.bf16.gmra.mrb[0].mxu0 %v1005
        %v1349 = vpop.f32.mrb[0].mxu0
        %v1350 = vadd.f32 %v836, %v1349
        %v1351 = vpop.f32.mrb[0].mxu0
        %v1352 = vadd.f32 %v836, %v1351
        %v1353 = vpop.f32.mrb[0].mxu0
        %v1354 = vadd.f32 %v841, %v1353
        %v1355 = vpop.f32.mrb[0].mxu0
        %v1356 = vadd.f32 %v841, %v1355
        %1357 = vmatprep.mubr.bf16.mxu0 0
        %1358 = vmatmul.mubr.bf16.gmra.mrb[0].mxu0 %v1008
        %v1359 = vpop.f32.mrb[0].mxu0
        %v1360 = vadd.f32 %v846, %v1359
        %v1361 = vpop.f32.mrb[0].mxu0
        %v1362 = vadd.f32 %v846, %v1361
        %v1363 = vpop.f32.mrb[0].mxu0
        %v1364 = vadd.f32 %v851, %v1363
        %v1365 = vpop.f32.mrb[0].mxu0
        %v1366 = vadd.f32 %v851, %v1365
        %1367 = vmatprep.mubr.bf16.mxu0 0
        %1368 = vmatmul.mubr.bf16.gmra.mrb[0].mxu0 %v1011
        %v1369 = vpop.f32.mrb[0].mxu0
        %v1370 = vadd.f32 %v856, %v1369
        %v1371 = vpop.f32.mrb[0].mxu0
        %v1372 = vadd.f32 %v856, %v1371
        %v1373 = vpop.f32.mrb[0].mxu0
        %v1374 = vadd.f32 %v861, %v1373
        %v1375 = vpop.f32.mrb[0].mxu0
        %v1376 = vadd.f32 %v861, %v1375
        %1377 = vmatprep.mubr.bf16.mxu0 0
        %1378 = vmatmul.mubr.bf16.gmra.mrb[0].mxu0 %v1014
        %v1379 = vpop.f32.mrb[0].mxu0
        %v1380 = vadd.f32 %v866, %v1379
        %v1381 = vpop.f32.mrb[0].mxu0
        %v1382 = vadd.f32 %v866, %v1381
        %v1383 = vpop.f32.mrb[0].mxu0
        %v1384 = vadd.f32 %v871, %v1383
        %v1385 = vpop.f32.mrb[0].mxu0
        %v1386 = vadd.f32 %v871, %v1385
        %1387 = vmatprep.mubr.bf16.mxu0 0
        %1388 = vmatmul.mubr.bf16.gmra.mrb[0].mxu0 %v1017
        %v1389 = vpop.f32.mrb[0].mxu0
        %v1390 = vadd.f32 %v876, %v1389
        %v1391 = vpop.f32.mrb[0].mxu0
        %v1392 = vadd.f32 %v876, %v1391
        %v1393 = vpop.f32.mrb[0].mxu0
        %v1394 = vadd.f32 %v881, %v1393
        %v1395 = vpop.f32.mrb[0].mxu0
        %v1396 = vadd.f32 %v881, %v1395
        %1397 = vmatprep.mubr.bf16.mxu0 0
        %1398 = vmatmul.mubr.bf16.gmra.mrb[0].mxu0 %v1020
        %v1399 = vpop.f32.mrb[0].mxu0
        %v1400 = vadd.f32 %v886, %v1399
        %v1401 = vpop.f32.mrb[0].mxu0
        %v1402 = vadd.f32 %v886, %v1401
        %v1403 = vpop.f32.mrb[0].mxu0
        %v1404 = vadd.f32 %v891, %v1403
        %v1405 = vpop.f32.mrb[0].mxu0
        %v1406 = vadd.f32 %v891, %v1405
        %1407 = vdwg.mxu0
        %v1408 = vmax.f32 %v1057, 0.0
        %v1409 = vmax.f32 %v1059, 0.0
        %v1410 = vmax.f32 %v1250, 0.0
        %v1411 = vmax.f32 %v1252, 0.0
        %v1412 = vmax.f32 %v1061, 0.0
        %v1413 = vmax.f32 %v1063, 0.0
        %v1414 = vmax.f32 %v1254, 0.0
        %v1415 = vmax.f32 %v1256, 0.0
        %v1416 = vmax.f32 %v1067, 0.0
        %v1417 = vmax.f32 %v1069, 0.0
        %v1418 = vmax.f32 %v1260, 0.0
        %v1419 = vmax.f32 %v1262, 0.0
        %v1420 = vmax.f32 %v1071, 0.0
        %v1421 = vmax.f32 %v1073, 0.0
        %v1422 = vmax.f32 %v1264, 0.0
        %v1423 = vmax.f32 %v1266, 0.0
        %v1424 = vmax.f32 %v1077, 0.0
        %v1425 = vmax.f32 %v1079, 0.0
        %v1426 = vmax.f32 %v1270, 0.0
        %v1427 = vmax.f32 %v1272, 0.0
        %v1428 = vmax.f32 %v1081, 0.0
        %v1429 = vmax.f32 %v1083, 0.0
        %v1430 = vmax.f32 %v1274, 0.0
        %v1431 = vmax.f32 %v1276, 0.0
        %v1432 = vmax.f32 %v1087, 0.0
        %v1433 = vmax.f32 %v1089, 0.0
        %v1434 = vmax.f32 %v1280, 0.0
        %v1435 = vmax.f32 %v1282, 0.0
        %v1436 = vmax.f32 %v1091, 0.0
        %v1437 = vmax.f32 %v1093, 0.0
        %v1438 = vmax.f32 %v1284, 0.0
        %v1439 = vmax.f32 %v1286, 0.0
        %v1440 = vmax.f32 %v1097, 0.0
        %v1441 = vmax.f32 %v1099, 0.0
        %v1442 = vmax.f32 %v1290, 0.0
        %v1443 = vmax.f32 %v1292, 0.0
        %v1444 = vmax.f32 %v1101, 0.0
        %v1445 = vmax.f32 %v1103, 0.0
        %v1446 = vmax.f32 %v1294, 0.0
        %v1447 = vmax.f32 %v1296, 0.0
        %v1448 = vmax.f32 %v1107, 0.0
        %v1449 = vmax.f32 %v1109, 0.0
        %v1450 = vmax.f32 %v1300, 0.0
        %v1451 = vmax.f32 %v1302, 0.0
        %v1452 = vmax.f32 %v1111, 0.0
        %v1453 = vmax.f32 %v1113, 0.0
        %v1454 = vmax.f32 %v1304, 0.0
        %v1455 = vmax.f32 %v1306, 0.0
        %v1456 = vmax.f32 %v1117, 0.0
        %v1457 = vmax.f32 %v1119, 0.0
        %v1458 = vmax.f32 %v1310, 0.0
        %v1459 = vmax.f32 %v1312, 0.0
        %v1460 = vmax.f32 %v1121, 0.0
        %v1461 = vmax.f32 %v1123, 0.0
        %v1462 = vmax.f32 %v1314, 0.0
        %v1463 = vmax.f32 %v1316, 0.0
        %v1464 = vmax.f32 %v1127, 0.0
        %v1465 = vmax.f32 %v1129, 0.0
        %v1466 = vmax.f32 %v1320, 0.0
        %v1467 = vmax.f32 %v1322, 0.0
        %v1468 = vmax.f32 %v1131, 0.0
        %v1469 = vmax.f32 %v1133, 0.0
        %v1470 = vmax.f32 %v1324, 0.0
        %v1471 = vmax.f32 %v1326, 0.0
        %v1472 = vmax.f32 %v1137, 0.0
        %v1473 = vmax.f32 %v1139, 0.0
        %v1474 = vmax.f32 %v1330, 0.0
        %v1475 = vmax.f32 %v1332, 0.0
        %v1476 = vmax.f32 %v1141, 0.0
        %v1477 = vmax.f32 %v1143, 0.0
        %v1478 = vmax.f32 %v1334, 0.0
        %v1479 = vmax.f32 %v1336, 0.0
        %v1480 = vmax.f32 %v1147, 0.0
        %v1481 = vmax.f32 %v1149, 0.0
        %v1482 = vmax.f32 %v1340, 0.0
        %v1483 = vmax.f32 %v1342, 0.0
        %v1484 = vmax.f32 %v1151, 0.0
        %v1485 = vmax.f32 %v1153, 0.0
        %v1486 = vmax.f32 %v1344, 0.0
        %v1487 = vmax.f32 %v1346, 0.0
        %v1488 = vmax.f32 %v1157, 0.0
        %v1489 = vmax.f32 %v1159, 0.0
        %v1490 = vmax.f32 %v1350, 0.0
        %v1491 = vmax.f32 %v1352, 0.0
        %v1492 = vmax.f32 %v1161, 0.0
        %v1493 = vmax.f32 %v1163, 0.0
        %v1494 = vmax.f32 %v1354, 0.0
        %v1495 = vmax.f32 %v1356, 0.0
        %v1496 = vmax.f32 %v1167, 0.0
        %v1497 = vmax.f32 %v1169, 0.0
        %v1498 = vmax.f32 %v1360, 0.0
        %v1499 = vmax.f32 %v1362, 0.0
        %v1500 = vmax.f32 %v1171, 0.0
        %v1501 = vmax.f32 %v1173, 0.0
        %v1502 = vmax.f32 %v1364, 0.0
        %v1503 = vmax.f32 %v1366, 0.0
        %v1504 = vmax.f32 %v1177, 0.0
        %v1505 = vmax.f32 %v1179, 0.0
        %v1506 = vmax.f32 %v1370, 0.0
        %v1507 = vmax.f32 %v1372, 0.0
        %v1508 = vmax.f32 %v1181, 0.0
        %v1509 = vmax.f32 %v1183, 0.0
        %v1510 = vmax.f32 %v1374, 0.0
        %v1511 = vmax.f32 %v1376, 0.0
        %v1512 = vmax.f32 %v1187, 0.0
        %v1513 = vmax.f32 %v1189, 0.0
        %v1514 = vmax.f32 %v1380, 0.0
        %v1515 = vmax.f32 %v1382, 0.0
        %v1516 = vmax.f32 %v1191, 0.0
        %v1517 = vmax.f32 %v1193, 0.0
        %v1518 = vmax.f32 %v1384, 0.0
        %v1519 = vmax.f32 %v1386, 0.0
        %v1520 = vmax.f32 %v1197, 0.0
        %v1521 = vmax.f32 %v1199, 0.0
        %v1522 = vmax.f32 %v1390, 0.0
        %v1523 = vmax.f32 %v1392, 0.0
        %v1524 = vmax.f32 %v1201, 0.0
        %v1525 = vmax.f32 %v1203, 0.0
        %v1526 = vmax.f32 %v1394, 0.0
        %v1527 = vmax.f32 %v1396, 0.0
        %v1528 = vmax.f32 %v1207, 0.0
        %v1529 = vmax.f32 %v1209, 0.0
        %v1530 = vmax.f32 %v1400, 0.0
        %v1531 = vmax.f32 %v1402, 0.0
        %v1532 = vmax.f32 %v1211, 0.0
        %v1533 = vmax.f32 %v1213, 0.0
        %v1534 = vmax.f32 %v1404, 0.0
        %v1535 = vmax.f32 %v1406, 0.0
        %v1536 = vld [vmem:[%s5] sm:$0xff]
        %v1537 = vld [vmem:[%s5 + $0x8] sm:$0xff]
        %v1538 = vld [vmem:[%s5 + $0x10] sm:$0xff]
        %v1539 = vld [vmem:[%s5 + $0x18] sm:$0xff]
        %v1540 = vld [vmem:[%s5 + $0x20] sm:$0xff]
        %v1541 = vld [vmem:[%s5 + $0x28] sm:$0xff]
        %v1542 = vld [vmem:[%s5 + $0x30] sm:$0xff]
        %v1543 = vld [vmem:[%s5 + $0x38] sm:$0xff]
        %v1544 = vpack.c.bf16 %v1412, %v1408
        %v1545 = vpack.c.bf16 %v1413, %v1409
        %v1546 = vpack.c.bf16 %v1414, %v1410
        %v1547 = vpack.c.bf16 %v1415, %v1411
        %v1548 = vpack.c.bf16 %v1420, %v1416
        %v1549 = vpack.c.bf16 %v1421, %v1417
        %v1550 = vpack.c.bf16 %v1422, %v1418
        %v1551 = vpack.c.bf16 %v1423, %v1419
        %v1552 = vpack.c.bf16 %v1428, %v1424
        %v1553 = vpack.c.bf16 %v1429, %v1425
        %v1554 = vpack.c.bf16 %v1430, %v1426
        %v1555 = vpack.c.bf16 %v1431, %v1427
        %v1556 = vpack.c.bf16 %v1436, %v1432
        %v1557 = vpack.c.bf16 %v1437, %v1433
        %v1558 = vpack.c.bf16 %v1438, %v1434
        %v1559 = vpack.c.bf16 %v1439, %v1435
        %v1560 = vpack.c.bf16 %v1444, %v1440
        %v1561 = vpack.c.bf16 %v1445, %v1441
        %v1562 = vpack.c.bf16 %v1446, %v1442
        %v1563 = vpack.c.bf16 %v1447, %v1443
        %v1564 = vpack.c.bf16 %v1452, %v1448
        %v1565 = vpack.c.bf16 %v1453, %v1449
        %v1566 = vpack.c.bf16 %v1454, %v1450
        %v1567 = vpack.c.bf16 %v1455, %v1451
        %v1568 = vpack.c.bf16 %v1460, %v1456
        %v1569 = vpack.c.bf16 %v1461, %v1457
        %v1570 = vpack.c.bf16 %v1462, %v1458
        %v1571 = vpack.c.bf16 %v1463, %v1459
        %v1572 = vpack.c.bf16 %v1468, %v1464
        %v1573 = vpack.c.bf16 %v1469, %v1465
        %v1574 = vpack.c.bf16 %v1470, %v1466
        %v1575 = vpack.c.bf16 %v1471, %v1467
        %v1576 = vpack.c.bf16 %v1476, %v1472
        %v1577 = vpack.c.bf16 %v1477, %v1473
        %v1578 = vpack.c.bf16 %v1478, %v1474
        %v1579 = vpack.c.bf16 %v1479, %v1475
        %v1580 = vpack.c.bf16 %v1484, %v1480
        %v1581 = vpack.c.bf16 %v1485, %v1481
        %v1582 = vpack.c.bf16 %v1486, %v1482
        %v1583 = vpack.c.bf16 %v1487, %v1483
        %v1584 = vpack.c.bf16 %v1492, %v1488
        %v1585 = vpack.c.bf16 %v1493, %v1489
        %v1586 = vpack.c.bf16 %v1494, %v1490
        %v1587 = vpack.c.bf16 %v1495, %v1491
        %v1588 = vpack.c.bf16 %v1500, %v1496
        %v1589 = vpack.c.bf16 %v1501, %v1497
        %v1590 = vpack.c.bf16 %v1502, %v1498
        %v1591 = vpack.c.bf16 %v1503, %v1499
        %v1592 = vpack.c.bf16 %v1508, %v1504
        %v1593 = vpack.c.bf16 %v1509, %v1505
        %v1594 = vpack.c.bf16 %v1510, %v1506
        %v1595 = vpack.c.bf16 %v1511, %v1507
        %v1596 = vpack.c.bf16 %v1516, %v1512
        %v1597 = vpack.c.bf16 %v1517, %v1513
        %v1598 = vpack.c.bf16 %v1518, %v1514
        %v1599 = vpack.c.bf16 %v1519, %v1515
        %v1600 = vpack.c.bf16 %v1524, %v1520
        %v1601 = vpack.c.bf16 %v1525, %v1521
        %v1602 = vpack.c.bf16 %v1526, %v1522
        %v1603 = vpack.c.bf16 %v1527, %v1523
        %v1604 = vpack.c.bf16 %v1532, %v1528
        %v1605 = vpack.c.bf16 %v1533, %v1529
        %v1606 = vpack.c.bf16 %v1534, %v1530
        %v1607 = vpack.c.bf16 %v1535, %v1531
        %v1608 = vld [vmem:[%s6] sm:$0xff]
        %v1609 = vld [vmem:[%s6 + $0x8] sm:$0xff]
        %v1610 = vld [vmem:[%s6 + $0x10] sm:$0xff]
        %v1611 = vld [vmem:[%s6 + $0x18] sm:$0xff]
        %v1612 = vld [vmem:[%s6 + $0x20] sm:$0xff]
        %v1613 = vld [vmem:[%s6 + $0x28] sm:$0xff]
        %v1614 = vld [vmem:[%s6 + $0x30] sm:$0xff]
        %v1615 = vld [vmem:[%s6 + $0x38] sm:$0xff]
        %1617 = vset.pattern.permute.xlu0 0
        %1618 = vperm.xlu0 %1617, %v1608
        %v1619 = vpop.permute.xlu0 %1618
        %1622 = vset.pattern.permute.xlu0 0
        %1623 = vperm.xlu0 %1622, %v1609
        %v1624 = vpop.permute.xlu0 %1623
        %1627 = vset.pattern.permute.xlu0 0
        %1628 = vperm.xlu0 %1627, %v1610
        %v1629 = vpop.permute.xlu0 %1628
        %1632 = vset.pattern.permute.xlu0 0
        %1633 = vperm.xlu0 %1632, %v1611
        %v1634 = vpop.permute.xlu0 %1633
        %1637 = vset.pattern.permute.xlu0 0
        %1638 = vperm.xlu0 %1637, %v1612
        %v1639 = vpop.permute.xlu0 %1638
        %1642 = vset.pattern.permute.xlu0 0
        %1643 = vperm.xlu0 %1642, %v1613
        %v1644 = vpop.permute.xlu0 %1643
        %1647 = vset.pattern.permute.xlu0 0
        %1648 = vperm.xlu0 %1647, %v1614
        %v1649 = vpop.permute.xlu0 %1648
        %1652 = vset.pattern.permute.xlu0 0
        %1653 = vperm.xlu0 %1652, %v1615
        %v1654 = vpop.permute.xlu0 %1653
        %v1664 = vunpack.c.l.b16 %v1536
        %v1665 = vunpack.c.h.b16 %v1536
        %v1666 = vunpack.c.l.b16 %v1537
        %v1667 = vunpack.c.h.b16 %v1537
        %v1668 = vunpack.c.l.b16 %v1538
        %v1669 = vunpack.c.h.b16 %v1538
        %v1670 = vunpack.c.l.b16 %v1539
        %v1671 = vunpack.c.h.b16 %v1539
        %v1672 = vunpack.c.l.b16 %v1540
        %v1673 = vunpack.c.h.b16 %v1540
        %v1674 = vunpack.c.l.b16 %v1541
        %v1675 = vunpack.c.h.b16 %v1541
        %v1676 = vunpack.c.l.b16 %v1542
        %v1677 = vunpack.c.h.b16 %v1542
        %v1678 = vunpack.c.l.b16 %v1543
        %v1679 = vunpack.c.h.b16 %v1543
        %v1680 = vpack.c.b16 %v1666, %v1664
        %v1681 = vpack.c.b16 %v1667, %v1665
        %v1682 = vpack.c.b16 %v1670, %v1668
        %v1683 = vpack.c.b16 %v1671, %v1669
        %v1684 = vpack.c.b16 %v1674, %v1672
        %v1685 = vpack.c.b16 %v1675, %v1673
        %v1686 = vpack.c.b16 %v1678, %v1676
        %v1687 = vpack.c.b16 %v1679, %v1677
        %1696 = vmatprep.subr.bf16.mxu0 %v1545
        %1697 = vmatpush1.bf16.msra.mxu0 %v1544
        %1698 = vmatprep.subr.bf16.mxu0 %v1549
        %1699 = vmatpush1.bf16.msra.mxu0 %v1548
        %1700 = vmatprep.subr.bf16.mxu0 %v1553
        %1701 = vmatpush1.bf16.msra.mxu0 %v1552
        %1702 = vmatprep.subr.bf16.mxu0 %v1557
        %1703 = vmatpush1.bf16.msra.mxu0 %v1556
        %1704 = vmatprep.subr.bf16.mxu0 %v1561
        %1705 = vmatpush1.bf16.msra.mxu0 %v1560
        %1706 = vmatprep.subr.bf16.mxu0 %v1565
        %1707 = vmatpush1.bf16.msra.mxu0 %v1564
        %1708 = vmatprep.subr.bf16.mxu0 %v1569
        %1709 = vmatpush1.bf16.msra.mxu0 %v1568
        %1710 = vmatprep.subr.bf16.mxu0 %v1573
        %1711 = vmatpush1.bf16.msra.mxu0 %v1572
        %1712 = vmatprep.subr.bf16.mxu0 %v1577
        %1713 = vmatpush1.bf16.msra.mxu0 %v1576
        %1714 = vmatprep.subr.bf16.mxu0 %v1581
        %1715 = vmatpush1.bf16.msra.mxu0 %v1580
        %1716 = vmatprep.subr.bf16.mxu0 %v1585
        %1717 = vmatpush1.bf16.msra.mxu0 %v1584
        %1718 = vmatprep.subr.bf16.mxu0 %v1589
        %1719 = vmatpush1.bf16.msra.mxu0 %v1588
        %1720 = vmatprep.subr.bf16.mxu0 %v1593
        %1721 = vmatpush1.bf16.msra.mxu0 %v1592
        %1722 = vmatprep.subr.bf16.mxu0 %v1597
        %1723 = vmatpush1.bf16.msra.mxu0 %v1596
        %1724 = vmatprep.subr.bf16.mxu0 %v1601
        %1725 = vmatpush1.bf16.msra.mxu0 %v1600
        %1726 = vmatprep.subr.bf16.mxu0 %v1605
        %1727 = vmatpush1.bf16.msra.mxu0 %v1604
        %1728 = vmatprep.mubr.bf16.mxu0 %v1681
        %1729 = vmatmul.mubr.bf16.gmra.mrb[0].mxu0 %v1680
        %v1730 = vpop.f32.mrb[0].mxu0
        %v1731 = vadd.f32 %v1619, %v1730
        %v1732 = vpop.f32.mrb[0].mxu0
        %v1733 = vadd.f32 %v1619, %v1732
        %v1734 = vpop.f32.mrb[0].mxu0
        %v1735 = vadd.f32 %v1624, %v1734
        %v1736 = vpop.f32.mrb[0].mxu0
        %v1737 = vadd.f32 %v1624, %v1736
        %1738 = vmatprep.mubr.bf16.mxu0 %v1683
        %1739 = vmatmul.mubr.bf16.gmra.mrb[0].mxu0 %v1682
        %v1740 = vpop.f32.mrb[0].mxu0
        %v1741 = vadd.f32 %v1629, %v1740
        %v1742 = vpop.f32.mrb[0].mxu0
        %v1743 = vadd.f32 %v1629, %v1742
        %v1744 = vpop.f32.mrb[0].mxu0
        %v1745 = vadd.f32 %v1634, %v1744
        %v1746 = vpop.f32.mrb[0].mxu0
        %v1747 = vadd.f32 %v1634, %v1746
        %1748 = vmatprep.mubr.bf16.mxu0 %v1685
        %1749 = vmatmul.mubr.bf16.gmra.mrb[0].mxu0 %v1684
        %v1750 = vpop.f32.mrb[0].mxu0
        %v1751 = vadd.f32 %v1639, %v1750
        %v1752 = vpop.f32.mrb[0].mxu0
        %v1753 = vadd.f32 %v1639, %v1752
        %v1754 = vpop.f32.mrb[0].mxu0
        %v1755 = vadd.f32 %v1644, %v1754
        %v1756 = vpop.f32.mrb[0].mxu0
        %v1757 = vadd.f32 %v1644, %v1756
        %1758 = vmatprep.mubr.bf16.mxu0 %v1687
        %1759 = vmatmul.mubr.bf16.gmra.mrb[0].mxu0 %v1686
        %v1760 = vpop.f32.mrb[0].mxu0
        %v1761 = vadd.f32 %v1649, %v1760
        %v1762 = vpop.f32.mrb[0].mxu0
        %v1763 = vadd.f32 %v1649, %v1762
        %v1764 = vpop.f32.mrb[0].mxu0
        %v1765 = vadd.f32 %v1654, %v1764
        %v1766 = vpop.f32.mrb[0].mxu0
        %v1767 = vadd.f32 %v1654, %v1766
        %1768 = vdwg.mxu0
        %1769 = vmatprep.subr.bf16.mxu0 %v1547
        %1770 = vmatpush1.bf16.msra.mxu0 %v1546
        %1771 = vmatprep.subr.bf16.mxu0 %v1551
        %1772 = vmatpush1.bf16.msra.mxu0 %v1550
        %1773 = vmatprep.subr.bf16.mxu0 %v1555
        %1774 = vmatpush1.bf16.msra.mxu0 %v1554
        %1775 = vmatprep.subr.bf16.mxu0 %v1559
        %1776 = vmatpush1.bf16.msra.mxu0 %v1558
        %1777 = vmatprep.subr.bf16.mxu0 %v1563
        %1778 = vmatpush1.bf16.msra.mxu0 %v1562
        %1779 = vmatprep.subr.bf16.mxu0 %v1567
        %1780 = vmatpush1.bf16.msra.mxu0 %v1566
        %1781 = vmatprep.subr.bf16.mxu0 %v1571
        %1782 = vmatpush1.bf16.msra.mxu0 %v1570
        %1783 = vmatprep.subr.bf16.mxu0 %v1575
        %1784 = vmatpush1.bf16.msra.mxu0 %v1574
        %1785 = vmatprep.subr.bf16.mxu0 %v1579
        %1786 = vmatpush1.bf16.msra.mxu0 %v1578
        %1787 = vmatprep.subr.bf16.mxu0 %v1583
        %1788 = vmatpush1.bf16.msra.mxu0 %v1582
        %1789 = vmatprep.subr.bf16.mxu0 %v1587
        %1790 = vmatpush1.bf16.msra.mxu0 %v1586
        %1791 = vmatprep.subr.bf16.mxu0 %v1591
        %1792 = vmatpush1.bf16.msra.mxu0 %v1590
        %1793 = vmatprep.subr.bf16.mxu0 %v1595
        %1794 = vmatpush1.bf16.msra.mxu0 %v1594
        %1795 = vmatprep.subr.bf16.mxu0 %v1599
        %1796 = vmatpush1.bf16.msra.mxu0 %v1598
        %1797 = vmatprep.subr.bf16.mxu0 %v1603
        %1798 = vmatpush1.bf16.msra.mxu0 %v1602
        %1799 = vmatprep.subr.bf16.mxu0 %v1607
        %1800 = vmatpush1.bf16.msra.mxu0 %v1606
        %1801 = vmatprep.mubr.bf16.mxu0 %v1681
        %1802 = vmatmul.mubr.bf16.gmra.mrb[0].mxu0 %v1680
        %v1803 = vpop.f32.mrb[0].mxu0
        %v1804 = vadd.f32 %v1619, %v1803
        %v1805 = vpop.f32.mrb[0].mxu0
        %v1806 = vadd.f32 %v1619, %v1805
        %v1807 = vpop.f32.mrb[0].mxu0
        %v1808 = vadd.f32 %v1624, %v1807
        %v1809 = vpop.f32.mrb[0].mxu0
        %v1810 = vadd.f32 %v1624, %v1809
        %1811 = vmatprep.mubr.bf16.mxu0 %v1683
        %1812 = vmatmul.mubr.bf16.gmra.mrb[0].mxu0 %v1682
        %v1813 = vpop.f32.mrb[0].mxu0
        %v1814 = vadd.f32 %v1629, %v1813
        %v1815 = vpop.f32.mrb[0].mxu0
        %v1816 = vadd.f32 %v1629, %v1815
        %v1817 = vpop.f32.mrb[0].mxu0
        %v1818 = vadd.f32 %v1634, %v1817
        %v1819 = vpop.f32.mrb[0].mxu0
        %v1820 = vadd.f32 %v1634, %v1819
        %1821 = vmatprep.mubr.bf16.mxu0 %v1685
        %1822 = vmatmul.mubr.bf16.gmra.mrb[0].mxu0 %v1684
        %v1823 = vpop.f32.mrb[0].mxu0
        %v1824 = vadd.f32 %v1639, %v1823
        %v1825 = vpop.f32.mrb[0].mxu0
        %v1826 = vadd.f32 %v1639, %v1825
        %v1827 = vpop.f32.mrb[0].mxu0
        %v1828 = vadd.f32 %v1644, %v1827
        %v1829 = vpop.f32.mrb[0].mxu0
        %v1830 = vadd.f32 %v1644, %v1829
        %1831 = vmatprep.mubr.bf16.mxu0 %v1687
        %1832 = vmatmul.mubr.bf16.gmra.mrb[0].mxu0 %v1686
        %v1833 = vpop.f32.mrb[0].mxu0
        %v1834 = vadd.f32 %v1649, %v1833
        %v1835 = vpop.f32.mrb[0].mxu0
        %v1836 = vadd.f32 %v1649, %v1835
        %v1837 = vpop.f32.mrb[0].mxu0
        %v1838 = vadd.f32 %v1654, %v1837
        %v1839 = vpop.f32.mrb[0].mxu0
        %v1840 = vadd.f32 %v1654, %v1839
        %1841 = vdwg.mxu0
        %v1842 = vmax.f32 %v1731, 0.0
        %v1843 = vmax.f32 %v1733, 0.0
        %v1844 = vmax.f32 %v1804, 0.0
        %v1845 = vmax.f32 %v1806, 0.0
        %v1846 = vmax.f32 %v1735, 0.0
        %v1847 = vmax.f32 %v1737, 0.0
        %v1848 = vmax.f32 %v1808, 0.0
        %v1849 = vmax.f32 %v1810, 0.0
        %v1850 = vmax.f32 %v1741, 0.0
        %v1851 = vmax.f32 %v1743, 0.0
        %v1852 = vmax.f32 %v1814, 0.0
        %v1853 = vmax.f32 %v1816, 0.0
        %v1854 = vmax.f32 %v1745, 0.0
        %v1855 = vmax.f32 %v1747, 0.0
        %v1856 = vmax.f32 %v1818, 0.0
        %v1857 = vmax.f32 %v1820, 0.0
        %v1858 = vmax.f32 %v1751, 0.0
        %v1859 = vmax.f32 %v1753, 0.0
        %v1860 = vmax.f32 %v1824, 0.0
        %v1861 = vmax.f32 %v1826, 0.0
        %v1862 = vmax.f32 %v1755, 0.0
        %v1863 = vmax.f32 %v1757, 0.0
        %v1864 = vmax.f32 %v1828, 0.0
        %v1865 = vmax.f32 %v1830, 0.0
        %v1866 = vmax.f32 %v1761, 0.0
        %v1867 = vmax.f32 %v1763, 0.0
        %v1868 = vmax.f32 %v1834, 0.0
        %v1869 = vmax.f32 %v1836, 0.0
        %v1870 = vmax.f32 %v1765, 0.0
        %v1871 = vmax.f32 %v1767, 0.0
        %v1872 = vmax.f32 %v1838, 0.0
        %v1873 = vmax.f32 %v1840, 0.0
        %v1874 = vld [vmem:[%s7] sm:$0xff]
        %v1875 = vld [vmem:[%s7 + $0x8] sm:$0xff]
        %v1876 = vld [vmem:[%s7 + $0x10] sm:$0xff]
        %v1877 = vld [vmem:[%s7 + $0x18] sm:$0xff]
        %v1878 = vld [vmem:[%s7 + $0x20] sm:$0xff]
        %v1879 = vld [vmem:[%s7 + $0x28] sm:$0xff]
        %v1880 = vld [vmem:[%s7 + $0x30] sm:$0xff]
        %v1881 = vld [vmem:[%s7 + $0x38] sm:$0xff]
        %1883 = vset.pattern.permute.xlu0 0
        %1884 = vperm.xlu0 %1883, %v1874
        %v1885 = vpop.permute.xlu0 %1884
        %1888 = vset.pattern.permute.xlu0 0
        %1889 = vperm.xlu0 %1888, %v1875
        %v1890 = vpop.permute.xlu0 %1889
        %1893 = vset.pattern.permute.xlu0 0
        %1894 = vperm.xlu0 %1893, %v1876
        %v1895 = vpop.permute.xlu0 %1894
        %1898 = vset.pattern.permute.xlu0 0
        %1899 = vperm.xlu0 %1898, %v1877
        %v1900 = vpop.permute.xlu0 %1899
        %1903 = vset.pattern.permute.xlu0 0
        %1904 = vperm.xlu0 %1903, %v1878
        %v1905 = vpop.permute.xlu0 %1904
        %1908 = vset.pattern.permute.xlu0 0
        %1909 = vperm.xlu0 %1908, %v1879
        %v1910 = vpop.permute.xlu0 %1909
        %1913 = vset.pattern.permute.xlu0 0
        %1914 = vperm.xlu0 %1913, %v1880
        %v1915 = vpop.permute.xlu0 %1914
        %1918 = vset.pattern.permute.xlu0 0
        %1919 = vperm.xlu0 %1918, %v1881
        %v1920 = vpop.permute.xlu0 %1919
        %v1922 = vmul.f32 %v1842, %v1885
        %v1923 = vmul.f32 %v1843, %v1885
        %v1924 = vmul.f32 %v1844, %v1885
        %v1925 = vmul.f32 %v1845, %v1885
        %v1926 = vmul.f32 %v1846, %v1890
        %v1927 = vmul.f32 %v1847, %v1890
        %v1928 = vmul.f32 %v1848, %v1890
        %v1929 = vmul.f32 %v1849, %v1890
        %v1930 = vmul.f32 %v1850, %v1895
        %v1931 = vmul.f32 %v1851, %v1895
        %v1932 = vmul.f32 %v1852, %v1895
        %v1933 = vmul.f32 %v1853, %v1895
        %v1934 = vmul.f32 %v1854, %v1900
        %v1935 = vmul.f32 %v1855, %v1900
        %v1936 = vmul.f32 %v1856, %v1900
        %v1937 = vmul.f32 %v1857, %v1900
        %v1938 = vmul.f32 %v1858, %v1905
        %v1939 = vmul.f32 %v1859, %v1905
        %v1940 = vmul.f32 %v1860, %v1905
        %v1941 = vmul.f32 %v1861, %v1905
        %v1942 = vmul.f32 %v1862, %v1910
        %v1943 = vmul.f32 %v1863, %v1910
        %v1944 = vmul.f32 %v1864, %v1910
        %v1945 = vmul.f32 %v1865, %v1910
        %v1946 = vmul.f32 %v1866, %v1915
        %v1947 = vmul.f32 %v1867, %v1915
        %v1948 = vmul.f32 %v1868, %v1915
        %v1949 = vmul.f32 %v1869, %v1915
        %v1950 = vmul.f32 %v1870, %v1920
        %v1951 = vmul.f32 %v1871, %v1920
        %v1952 = vmul.f32 %v1872, %v1920
        %v1953 = vmul.f32 %v1873, %v1920
        %v1954 = vadd.f32 %v1922, %v1926
        %v1955 = vadd.f32 %v1954, %v1930
        %v1956 = vadd.f32 %v1955, %v1934
        %v1957 = vadd.f32 %v1956, %v1938
        %v1958 = vadd.f32 %v1957, %v1942
        %v1959 = vadd.f32 %v1958, %v1946
        %v1960 = vadd.f32 %v1959, %v1950
        %v1961 = vrot.slane %v1960, 4
        %v1962 = vadd.f32 %v1960, %v1961
        %v1963 = vrot.slane %v1962, 2
        %v1964 = vadd.f32 %v1962, %v1963
        %v1965 = vrot.slane %v1964, 1
        %v1966 = vadd.f32 %v1964, %v1965
        %v1967 = vadd.f32 %v1923, %v1927
        %v1968 = vadd.f32 %v1967, %v1931
        %v1969 = vadd.f32 %v1968, %v1935
        %v1970 = vadd.f32 %v1969, %v1939
        %v1971 = vadd.f32 %v1970, %v1943
        %v1972 = vadd.f32 %v1971, %v1947
        %v1973 = vadd.f32 %v1972, %v1951
        %v1974 = vrot.slane %v1973, 4
        %v1975 = vadd.f32 %v1973, %v1974
        %v1976 = vrot.slane %v1975, 2
        %v1977 = vadd.f32 %v1975, %v1976
        %v1978 = vrot.slane %v1977, 1
        %v1979 = vadd.f32 %v1977, %v1978
        %v1980 = vadd.f32 %v1924, %v1928
        %v1981 = vadd.f32 %v1980, %v1932
        %v1982 = vadd.f32 %v1981, %v1936
        %v1983 = vadd.f32 %v1982, %v1940
        %v1984 = vadd.f32 %v1983, %v1944
        %v1985 = vadd.f32 %v1984, %v1948
        %v1986 = vadd.f32 %v1985, %v1952
        %v1987 = vrot.slane %v1986, 4
        %v1988 = vadd.f32 %v1986, %v1987
        %v1989 = vrot.slane %v1988, 2
        %v1990 = vadd.f32 %v1988, %v1989
        %v1991 = vrot.slane %v1990, 1
        %v1992 = vadd.f32 %v1990, %v1991
        %v1993 = vadd.f32 %v1925, %v1929
        %v1994 = vadd.f32 %v1993, %v1933
        %v1995 = vadd.f32 %v1994, %v1937
        %v1996 = vadd.f32 %v1995, %v1941
        %v1997 = vadd.f32 %v1996, %v1945
        %v1998 = vadd.f32 %v1997, %v1949
        %v1999 = vadd.f32 %v1998, %v1953
        %v2000 = vrot.slane %v1999, 4
        %v2001 = vadd.f32 %v1999, %v2000
        %v2002 = vrot.slane %v2001, 2
        %v2003 = vadd.f32 %v2001, %v2002
        %v2004 = vrot.slane %v2003, 1
        %v2005 = vadd.f32 %v2003, %v2004
        %v2006 = vld [vmem:[#allocation2] sm:$0x1]
        %2008 = vset.pattern.permute.xlu0 0
        %2009 = vperm.xlu0 %2008, %v2006
        %v2010 = vpop.permute.xlu0 %2009
        %v2012 = vlaneseq
        %v2013 = vshrl.u32 %v2012, 7
        %v2014 = vsub.s32 0, %v2013
        %v2015 = vrot.slane %v2010, %v2014
        %v2016 = vadd.f32 %v1966, %v2015
        %v2017 = vadd.f32 %v1979, %v2015
        %v2018 = vadd.f32 %v1992, %v2015
        %v2019 = vadd.f32 %v2005, %v2015
        %v2024 = vcombine.low %v2016, %v2017
        %v2025 = vcombine.low %v2018, %v2019
        %v2027 = vunpack.c.l.s4 1966171168
        %v2028 = vunpack.c.0.s8 %v2027
        %v2029 = vlaneseq
        %v2030 = vshrl.u32 %v2029, 7
        %v2031 = vsub.s32 %v2028, %v2030
        %v2032 = vrot.slane %v2024, %v2031
        %v2034 = vunpack.c.l.s4 1966171168
        %v2035 = vunpack.c.0.s8 %v2034
        %v2036 = vlaneseq
        %v2037 = vshrl.u32 %v2036, 7
        %v2038 = vsub.s32 %v2035, %v2037
        %v2039 = vrot.slane %v2025, %v2038
        %v2040 = vcombine.low %v2032, %v2039
        %v2042 = vunpack.c.l.s4 1966171168
        %v2043 = vunpack.c.0.s8 %v2042
        %v2044 = vlaneseq
        %v2045 = vshrl.u32 %v2044, 7
        %v2046 = vsub.s32 %v2043, %v2045
        %v2047 = vrot.slane %v2040, %v2046
        %v2049 = vlaneseq
        %vm2050 = vcmp.ge.s32.totalorder %v2049, 0
        %vm2051 = vcmp.lt.s32.totalorder %v2049, 512
        %vm2052 = vmand %vm2050, %vm2051
        %2053 = vst.msk [vmem:[%s358] sm:$0xf] %vm2052, %v2047
        %s2054 = sand.u32 %s227, 1
        %s2055 = scalar_lea.sflag [#allocation5], %s2054
        %s2056 = sand.u32 %s227, 1
        %s2057 = smul.addr %s2056, 4
        %s2058 = scalar_lea.vmem [#allocation4], %s2057
        // Predicated region
        $region80: #{tpu_custom_call.1} parent=74 // pred_check
          %p2059 = pneg %p237
        $region81: #{tpu_custom_call.1} parent=74 // pred_check_branch
          %2061 = sbr.rel (%p2059) target = $region83
        $region82: #{tpu_custom_call.1} parent=74 // pred_region
          %s2062 = smul.u32 4, %s25
          %s2064 = ssub.s32 64, 64
          %2065 = vsyncadd %s2055, %s2064
          %s2066 = smul.addr %s2062, 16
          %s2067 = scalar_lea.hbm %s9, %s2066
          %s2069 = sshll.u32 %s2058, 4
          %s2070 = int_to_ptr.vmem [resolvable:$true] %s2069
          %2072 = dma.vmem_to_hbm [thread:$0]  %s2070, 64, %s2067, %s2055
        $region83: #{tpu_custom_call.1} parent=74 // pred_fallthru
          _
      $region75: #{tpu_custom_call.1} parent=5 // pred_fallthru
        _
      %p2073 = scmp.le.s32.totalorder 2, %s20
      // Predicated region
      $region84: #{tpu_custom_call.1} parent=5 // pred_check
        %p2074 = pneg %p2073
      $region85: #{tpu_custom_call.1} parent=5 // pred_check_branch
        %2076 = sbr.rel (%p2074) target = $region87
      $region86: #{tpu_custom_call.1} parent=5 // pred_region
        %s2077 = ssub.s32 %s20, 2
        // Predicated region
        $region88: #{tpu_custom_call.1} parent=86 // pred_check
          %p2078 = pneg %p243
        $region89: #{tpu_custom_call.1} parent=86 // pred_check_branch
          %2080 = sbr.rel (%p2078) target = $region91
        $region90: #{tpu_custom_call.1} parent=86 // pred_region
          %s2081 = sand.u32 %s228, 1
          %s2082 = scalar_lea.sflag [#allocation5], %s2081
          %s2083 = sand.u32 %s228, 1
          %s2084 = smul.addr %s2083, 4
          %s2085 = scalar_lea.vmem [#allocation4], %s2084
          %2086 = dma.done %s2082, 64
        $region91: #{tpu_custom_call.1} parent=86 // pred_fallthru
          _
      $region87: #{tpu_custom_call.1} parent=5 // pred_fallthru
        _
    $region6: #{tpu_custom_call.1} parent=1 // loop_footer
      %s24 = sadd.s32 1, %s20
    $region7: #{tpu_custom_call.1} parent=1 // loop_footer_branch
      %19 = sbr.rel target = $region3
    $region8: #{tpu_custom_call.1} parent=1 // loop_exit
      _
    %2087 = vsyncpa [#allocation5], 1
    %s2088 = scalar_lea.sflag [#allocation5], 1
    %2089 = vsyncpa %s2088, 1

</llo_original>
